<compile_context>
chip_gen: v5e
topology: v5e:2x2
jax: 0.10.0
libtpu: 0.0.40
codegen_flags: <defaults>
</compile_context>

<pallas_src>
import jax
import jax.numpy as jnp
from jax.experimental import pallas as pl
from jax.experimental.pallas import tpu as pltpu

LANE = 128          # lane width: final output dim is padded to this
SUBLANE = 8         # sublane granularity: batch tile rounded to this
MAX_BATCH_TILE = 512


def _round_up(n, m):
    return ((n + m - 1) // m) * m


def _cdiv(a, b):
    return (a + b - 1) // b


def _leaky_relu(x, slope=0.01):
    return jnp.where(x > 0, x, slope * x)


def _device_kind():
    try:
        return jax.devices()[0].device_kind.lower()
    except Exception:
        return ""


def _num_tensorcores():
    # v7x has 2 TensorCores per chip; the parallel batch-grid axis is how this
    # kernel uses the second one.  v5e / v6e are single-TC.
    kind = _device_kind()
    return 2 if ("v7" in kind or "7x" in kind) else 1


def _default_weight_dtype():
    # bf16 MXU inputs (f32 accumulation) on v6e / v7x; keep v5e / unknown on f32.
    kind = _device_kind()
    if "v6" in kind or "v7" in kind or "7x" in kind:
        return jnp.bfloat16
    return jnp.float32


# --------------------------------------------------------------------------
# Kernel
# --------------------------------------------------------------------------
def autoencoder_kernel(x_ref, *refs):
    """refs = (w1, b1, ..., wL, bL, out_ref).

    Linear + LeakyReLU for every layer except the last (the encoder/decoder
    boundary was fused at parameter-preparation time, so the activation
    pattern here is simply 'all but last')."""
    out_ref = refs[-1]
    param_refs = refs[:-1]
    n_layers = len(param_refs) // 2

    h = x_ref[...].astype(jnp.float32)
    for i in range(n_layers):
        w = param_refs[2 * i][...]
        b = param_refs[2 * i + 1][...]
        # Cast activations to the weight dtype (no-op on the f32 path) so the
        # MXU gets bf16 inputs on v6e/v7x; accumulate in f32.
        h = jnp.dot(h.astype(w.dtype), w, preferred_element_type=jnp.float32)
        h = h + b.astype(jnp.float32)
        if i < n_layers - 1:
            h = _leaky_relu(h)
    out_ref[...] = h.astype(out_ref.dtype)


# --------------------------------------------------------------------------
# Parameter preparation (run ONCE, outside the per-call path)
# --------------------------------------------------------------------------
def prepare_params(params, *, weight_dtype=jnp.float32):
    """Fuse layers 4 & 5, pad only the final output dim to 128 lanes, cast
    weights to `weight_dtype` (biases stay f32).  Returns (prepared, out_dim)."""
    # (h @ w4 + b4) @ w5 + b5 == h @ (w4 @ w5) + (b4 @ w5 + b5): no activation
    # between encoder output and decoder input, so this is exact (up to FP
    # reassociation) and removes the two worst-shaped (latent=16) dots.
    w4, b4, w5, b5 = params[6], params[7], params[8], params[9]
    hi = jax.lax.Precision.HIGHEST
    w45 = jnp.dot(w4, w5, precision=hi)
    b45 = jnp.dot(b4, w5, precision=hi) + b5

    fused = [params[0], params[1], params[2], params[3], params[4], params[5],
             w45, b45,
             params[10], params[11], params[12], params[13],
             params[14], params[15]]
    n_layers = len(fused) // 2

    out_dim = int(fused[-2].shape[1])
    out_dim_p = _round_up(out_dim, LANE)

    prepared = []
    for i in range(n_layers):
        w, b = fused[2 * i], fused[2 * i + 1]
        if i == n_layers - 1:
            # Zero-pad only the final output dim -> lane-dense unmasked HBM store.
            w = jnp.pad(w, ((0, 0), (0, out_dim_p - out_dim)))
            b = jnp.pad(b, ((0, 0), (0, out_dim_p - out_dim)))
        prepared.append(w.astype(weight_dtype))
        prepared.append(b.astype(jnp.float32))
    return prepared, out_dim


# --------------------------------------------------------------------------
# Forward wrapper
# --------------------------------------------------------------------------
def autoencoder_forward(x, prepared_params, *, batch_tile=None, min_grid_steps=None):
    """x: [batch, input_dim] float32.  prepared_params: output of prepare_params."""
    batch, input_dim = x.shape
    dtype = x.dtype
    n_layers = len(prepared_params) // 2
    out_dim_p = int(prepared_params[-2].shape[1])

    if min_grid_steps is None:
        min_grid_steps = 2 if _num_tensorcores() >= 2 else 1

    b8 = _round_up(max(batch, 1), SUBLANE)
    if batch_tile is None:
        tb = min(MAX_BATCH_TILE, _round_up(_cdiv(b8, min_grid_steps), SUBLANE))
    else:
        tb = _round_up(min(batch_tile, b8), SUBLANE)
    batch_p = _round_up(b8, tb)
    grid = (batch_p // tb,)

    x_p = jnp.pad(x, ((0, batch_p - batch), (0, 0))) if batch_p != batch else x

    # Input streamed UNPADDED in the feature dim (block last dim == array dim
    # is legal); weights/biases are full-array blocks pinned to block (0, 0)
    # so they stay VMEM-resident across all batch steps.
    in_specs = [pl.BlockSpec((tb, input_dim), lambda i: (i, 0))]
    for p in prepared_params:
        in_specs.append(pl.BlockSpec(p.shape, lambda i: (0, 0)))
    out_specs = pl.BlockSpec((tb, out_dim_p), lambda i: (i, 0))

    flops = 2 * batch_p * sum(
        int(prepared_params[2 * i].shape[0]) * int(prepared_params[2 * i].shape[1])
        for i in range(n_layers))
    bytes_accessed = sum(int(p.size) * p.dtype.itemsize for p in prepared_params)
    bytes_accessed += int(x_p.size) * x_p.dtype.itemsize
    bytes_accessed += batch_p * out_dim_p * jnp.dtype(dtype).itemsize

    out_padded = pl.pallas_call(
        autoencoder_kernel,
        out_shape=jax.ShapeDtypeStruct((batch_p, out_dim_p), dtype),
        grid=grid,
        in_specs=in_specs,
        out_specs=out_specs,
        compiler_params=pltpu.CompilerParams(
            dimension_semantics=("parallel",)),
        cost_estimate=pl.CostEstimate(
            flops=flops, transcendentals=0, bytes_accessed=bytes_accessed),
    )(x_p, *prepared_params)

    return out_padded[:batch, :]  # final slice of columns done by callers below


# --------------------------------------------------------------------------
# References & init
# --------------------------------------------------------------------------
def init_params(key, input_dim, latent_dim, l1, l2, l3, dtype=jnp.float32):
    """PyTorch-style uniform(-1/sqrt(fan_in), +1/sqrt(fan_in)) init.
    Weights as [in_features, out_features]; biases as [1, out_features]."""
    dims = [
        (input_dim, l1), (l1, l2), (l2, l3), (l3, latent_dim),   # encoder
        (latent_dim, l3), (l3, l2), (l2, l1), (l1, input_dim),   # decoder
    ]
    params = []
    for (fan_in, fan_out) in dims:
        key, kw, kb = jax.random.split(key, 3)
        bound = 1.0 / jnp.sqrt(fan_in)
        w = jax.random.uniform(kw, (fan_in, fan_out), dtype, -bound, bound)
        b = jax.random.uniform(kb, (1, fan_out), dtype, -bound, bound)
        params.extend([w, b])
    return params


def reference_forward(x, params):
    """Pure-JAX f32 reference matching the PyTorch module (unfused, 8 layers)."""
    h = x
    n_layers = len(params) // 2
    for i in range(n_layers):
        w, b = params[2 * i], params[2 * i + 1]
        h = h @ w + b
        if i not in (3, 7):          # no activation after enc L4 / dec L4
            h = jnp.where(h > 0, h, 0.01 * h)
    return h


def reference_forward_prepared(x, prepared_params, out_dim):
    """Pure-JAX reference using the SAME fused / dtype-cast params as the
    kernel (isolates kernel correctness from the bf16/fusion approximation)."""
    h = x.astype(jnp.float32)
    n_layers = len(prepared_params) // 2
    for i in range(n_layers):
        w = prepared_params[2 * i]
        b = prepared_params[2 * i + 1]
        h = jnp.dot(h.astype(w.dtype), w, preferred_element_type=jnp.float32)
        h = h + b.astype(jnp.float32)
        if i < n_layers - 1:
            h = jnp.where(h > 0, h, 0.01 * h)
    return h[:, :out_dim]


if __name__ == "__main__":
    # Shapes consistent with the module; batch=200 exercises batch padding
    # and (on v7x) a 2-step parallel batch grid.
    batch = 200
    input_dim = 32
    layer1_neurons = 64
    layer2_neurons = 48
    layer3_neurons = 40
    latent_dim = 16

    key = jax.random.PRNGKey(0)
    key, kx = jax.random.split(key)
    x = jax.random.normal(kx, (batch, input_dim), dtype=jnp.float32)

    params = init_params(key, input_dim, latent_dim,
                         layer1_neurons, layer2_neurons, layer3_neurons)

    # One-time parameter preparation (layer-4/5 fusion, padding, dtype cast).
    weight_dtype = _default_weight_dtype()
    prepared, out_dim = prepare_params(params, weight_dtype=weight_dtype)

    fwd = jax.jit(autoencoder_forward)
    out_full = fwd(x, prepared)
    out_full = jax.block_until_ready(out_full)
    out = out_full[:, :out_dim]

    assert out.shape == (batch, input_dim), out.shape

    # 1) Kernel vs. matched-precision fused reference (same params/dtypes):
    #    verifies the Pallas kernel itself to tight tolerance.
    ref_matched = reference_forward_prepared(x, prepared, out_dim)
    err_m = float(jnp.max(jnp.abs(out - ref_matched)))
    assert jnp.allclose(out, ref_matched, atol=1e-3, rtol=1e-3), \
        f"kernel mismatch vs matched reference, max err {err_m}"

    # 2) Kernel vs. pure-f32 module semantics: the layer-4/5 fusion and (on
    #    v6e/v7x) bf16 MXU inputs reassociate/round FP, so allow a looser,
    #    dtype-dependent tolerance.
    ref = reference_forward(x, params)
    tol = 1e-3 if weight_dtype == jnp.float32 else 1e-1
    err = float(jnp.max(jnp.abs(out - ref)))
    assert jnp.allclose(out, ref, atol=tol, rtol=tol), \
        f"mismatch vs f32 module reference, max err {err}"

    print("KERNEL_OK")
</pallas_src>

<mosaic_0001>
module attributes {stable_mosaic.version = 11 : i64} {
  func.func @autoencoder_kernel(%arg0: i32, %arg1: memref<200x32xf32, #tpu.memory_space<vmem>>, %arg2: memref<32x64xf32, #tpu.memory_space<vmem>>, %arg3: memref<1x64xf32, #tpu.memory_space<vmem>>, %arg4: memref<64x48xf32, #tpu.memory_space<vmem>>, %arg5: memref<1x48xf32, #tpu.memory_space<vmem>>, %arg6: memref<48x40xf32, #tpu.memory_space<vmem>>, %arg7: memref<1x40xf32, #tpu.memory_space<vmem>>, %arg8: memref<40x40xf32, #tpu.memory_space<vmem>>, %arg9: memref<1x40xf32, #tpu.memory_space<vmem>>, %arg10: memref<40x48xf32, #tpu.memory_space<vmem>>, %arg11: memref<1x48xf32, #tpu.memory_space<vmem>>, %arg12: memref<48x64xf32, #tpu.memory_space<vmem>>, %arg13: memref<1x64xf32, #tpu.memory_space<vmem>>, %arg14: memref<64x128xf32, #tpu.memory_space<vmem>>, %arg15: memref<1x128xf32, #tpu.memory_space<vmem>>, %arg16: memref<200x128xf32, #tpu.memory_space<vmem>>) attributes {dimension_semantics = [#tpu.dimension_semantics<parallel>], iteration_bounds = array<i64: 1>, scalar_prefetch = 0 : i64, scratch_operands = 0 : i64, tpu.core_type = #tpu.core_type<tc>, window_params = [{transform_indices = @transform_0, window_bounds = array<i64: 200, 32>}, {pipeline_mode = #tpu.pipeline_mode<synchronous>, transform_indices = @transform_1, window_bounds = array<i64: 32, 64>}, {pipeline_mode = #tpu.pipeline_mode<synchronous>, transform_indices = @transform_2, window_bounds = array<i64: 1, 64>}, {pipeline_mode = #tpu.pipeline_mode<synchronous>, transform_indices = @transform_3, window_bounds = array<i64: 64, 48>}, {pipeline_mode = #tpu.pipeline_mode<synchronous>, transform_indices = @transform_4, window_bounds = array<i64: 1, 48>}, {pipeline_mode = #tpu.pipeline_mode<synchronous>, transform_indices = @transform_5, window_bounds = array<i64: 48, 40>}, {pipeline_mode = #tpu.pipeline_mode<synchronous>, transform_indices = @transform_6, window_bounds = array<i64: 1, 40>}, {pipeline_mode = #tpu.pipeline_mode<synchronous>, transform_indices = @transform_7, window_bounds = array<i64: 40, 40>}, {pipeline_mode = #tpu.pipeline_mode<synchronous>, transform_indices = @transform_8, window_bounds = array<i64: 1, 40>}, {pipeline_mode = #tpu.pipeline_mode<synchronous>, transform_indices = @transform_9, window_bounds = array<i64: 40, 48>}, {pipeline_mode = #tpu.pipeline_mode<synchronous>, transform_indices = @transform_10, window_bounds = array<i64: 1, 48>}, {pipeline_mode = #tpu.pipeline_mode<synchronous>, transform_indices = @transform_11, window_bounds = array<i64: 48, 64>}, {pipeline_mode = #tpu.pipeline_mode<synchronous>, transform_indices = @transform_12, window_bounds = array<i64: 1, 64>}, {pipeline_mode = #tpu.pipeline_mode<synchronous>, transform_indices = @transform_13, window_bounds = array<i64: 64, 128>}, {pipeline_mode = #tpu.pipeline_mode<synchronous>, transform_indices = @transform_14, window_bounds = array<i64: 1, 128>}, {transform_indices = @transform_15, window_bounds = array<i64: 200, 128>}]} {
    %c0 = arith.constant 0 : index
    %c0_0 = arith.constant 0 : index
    %0 = vector.load %arg1[%c0, %c0_0] : memref<200x32xf32, #tpu.memory_space<vmem>>, vector<200x32xf32>
    %c0_1 = arith.constant 0 : index
    %c0_2 = arith.constant 0 : index
    %1 = vector.load %arg2[%c0_1, %c0_2] : memref<32x64xf32, #tpu.memory_space<vmem>>, vector<32x64xf32>
    %c0_3 = arith.constant 0 : index
    %c0_4 = arith.constant 0 : index
    %2 = vector.load %arg3[%c0_3, %c0_4] : memref<1x64xf32, #tpu.memory_space<vmem>>, vector<1x64xf32>
    %cst = arith.constant dense<0.000000e+00> : vector<200x64xf32>
    %3 = tpu.matmul %0, %1, %cst {dimension_numbers = #tpu.dot_dimension_numbers<[1], [0], [0], [1], [0, 0, 1, 1], [], []>} : vector<200x32xf32>, vector<32x64xf32>, vector<200x64xf32> -> vector<200x64xf32>
    %4 = vector.broadcast %2 : vector<1x64xf32> to vector<200x64xf32>
    %5 = arith.addf %3, %4 : vector<200x64xf32>
    %cst_5 = arith.constant 0.000000e+00 : f32
    %6 = vector.broadcast %cst_5 : f32 to vector<200x64xf32>
    %7 = arith.cmpf ogt, %5, %6 : vector<200x64xf32>
    %cst_6 = arith.constant 0.00999999977 : f32
    %8 = vector.broadcast %cst_6 : f32 to vector<200x64xf32>
    %9 = arith.mulf %8, %5 : vector<200x64xf32>
    %10 = arith.select %7, %5, %9 : vector<200x64xi1>, vector<200x64xf32>
    %c0_7 = arith.constant 0 : index
    %c0_8 = arith.constant 0 : index
    %11 = vector.load %arg4[%c0_7, %c0_8] : memref<64x48xf32, #tpu.memory_space<vmem>>, vector<64x48xf32>
    %c0_9 = arith.constant 0 : index
    %c0_10 = arith.constant 0 : index
    %12 = vector.load %arg5[%c0_9, %c0_10] : memref<1x48xf32, #tpu.memory_space<vmem>>, vector<1x48xf32>
    %cst_11 = arith.constant dense<0.000000e+00> : vector<200x48xf32>
    %13 = tpu.matmul %10, %11, %cst_11 {dimension_numbers = #tpu.dot_dimension_numbers<[1], [0], [0], [1], [0, 0, 1, 1], [], []>} : vector<200x64xf32>, vector<64x48xf32>, vector<200x48xf32> -> vector<200x48xf32>
    %14 = vector.broadcast %12 : vector<1x48xf32> to vector<200x48xf32>
    %15 = arith.addf %13, %14 : vector<200x48xf32>
    %cst_12 = arith.constant 0.000000e+00 : f32
    %16 = vector.broadcast %cst_12 : f32 to vector<200x48xf32>
    %17 = arith.cmpf ogt, %15, %16 : vector<200x48xf32>
    %cst_13 = arith.constant 0.00999999977 : f32
    %18 = vector.broadcast %cst_13 : f32 to vector<200x48xf32>
    %19 = arith.mulf %18, %15 : vector<200x48xf32>
    %20 = arith.select %17, %15, %19 : vector<200x48xi1>, vector<200x48xf32>
    %c0_14 = arith.constant 0 : index
    %c0_15 = arith.constant 0 : index
    %21 = vector.load %arg6[%c0_14, %c0_15] : memref<48x40xf32, #tpu.memory_space<vmem>>, vector<48x40xf32>
    %c0_16 = arith.constant 0 : index
    %c0_17 = arith.constant 0 : index
    %22 = vector.load %arg7[%c0_16, %c0_17] : memref<1x40xf32, #tpu.memory_space<vmem>>, vector<1x40xf32>
    %cst_18 = arith.constant dense<0.000000e+00> : vector<200x40xf32>
    %23 = tpu.matmul %20, %21, %cst_18 {dimension_numbers = #tpu.dot_dimension_numbers<[1], [0], [0], [1], [0, 0, 1, 1], [], []>} : vector<200x48xf32>, vector<48x40xf32>, vector<200x40xf32> -> vector<200x40xf32>
    %24 = vector.broadcast %22 : vector<1x40xf32> to vector<200x40xf32>
    %25 = arith.addf %23, %24 : vector<200x40xf32>
    %cst_19 = arith.constant 0.000000e+00 : f32
    %26 = vector.broadcast %cst_19 : f32 to vector<200x40xf32>
    %27 = arith.cmpf ogt, %25, %26 : vector<200x40xf32>
    %cst_20 = arith.constant 0.00999999977 : f32
    %28 = vector.broadcast %cst_20 : f32 to vector<200x40xf32>
    %29 = arith.mulf %28, %25 : vector<200x40xf32>
    %30 = arith.select %27, %25, %29 : vector<200x40xi1>, vector<200x40xf32>
    %c0_21 = arith.constant 0 : index
    %c0_22 = arith.constant 0 : index
    %31 = vector.load %arg8[%c0_21, %c0_22] : memref<40x40xf32, #tpu.memory_space<vmem>>, vector<40x40xf32>
    %c0_23 = arith.constant 0 : index
    %c0_24 = arith.constant 0 : index
    %32 = vector.load %arg9[%c0_23, %c0_24] : memref<1x40xf32, #tpu.memory_space<vmem>>, vector<1x40xf32>
    %cst_25 = arith.constant dense<0.000000e+00> : vector<200x40xf32>
    %33 = tpu.matmul %30, %31, %cst_25 {dimension_numbers = #tpu.dot_dimension_numbers<[1], [0], [0], [1], [0, 0, 1, 1], [], []>} : vector<200x40xf32>, vector<40x40xf32>, vector<200x40xf32> -> vector<200x40xf32>
    %34 = vector.broadcast %32 : vector<1x40xf32> to vector<200x40xf32>
    %35 = arith.addf %33, %34 : vector<200x40xf32>
    %cst_26 = arith.constant 0.000000e+00 : f32
    %36 = vector.broadcast %cst_26 : f32 to vector<200x40xf32>
    %37 = arith.cmpf ogt, %35, %36 : vector<200x40xf32>
    %cst_27 = arith.constant 0.00999999977 : f32
    %38 = vector.broadcast %cst_27 : f32 to vector<200x40xf32>
    %39 = arith.mulf %38, %35 : vector<200x40xf32>
    %40 = arith.select %37, %35, %39 : vector<200x40xi1>, vector<200x40xf32>
    %c0_28 = arith.constant 0 : index
    %c0_29 = arith.constant 0 : index
    %41 = vector.load %arg10[%c0_28, %c0_29] : memref<40x48xf32, #tpu.memory_space<vmem>>, vector<40x48xf32>
    %c0_30 = arith.constant 0 : index
    %c0_31 = arith.constant 0 : index
    %42 = vector.load %arg11[%c0_30, %c0_31] : memref<1x48xf32, #tpu.memory_space<vmem>>, vector<1x48xf32>
    %cst_32 = arith.constant dense<0.000000e+00> : vector<200x48xf32>
    %43 = tpu.matmul %40, %41, %cst_32 {dimension_numbers = #tpu.dot_dimension_numbers<[1], [0], [0], [1], [0, 0, 1, 1], [], []>} : vector<200x40xf32>, vector<40x48xf32>, vector<200x48xf32> -> vector<200x48xf32>
    %44 = vector.broadcast %42 : vector<1x48xf32> to vector<200x48xf32>
    %45 = arith.addf %43, %44 : vector<200x48xf32>
    %cst_33 = arith.constant 0.000000e+00 : f32
    %46 = vector.broadcast %cst_33 : f32 to vector<200x48xf32>
    %47 = arith.cmpf ogt, %45, %46 : vector<200x48xf32>
    %cst_34 = arith.constant 0.00999999977 : f32
    %48 = vector.broadcast %cst_34 : f32 to vector<200x48xf32>
    %49 = arith.mulf %48, %45 : vector<200x48xf32>
    %50 = arith.select %47, %45, %49 : vector<200x48xi1>, vector<200x48xf32>
    %c0_35 = arith.constant 0 : index
    %c0_36 = arith.constant 0 : index
    %51 = vector.load %arg12[%c0_35, %c0_36] : memref<48x64xf32, #tpu.memory_space<vmem>>, vector<48x64xf32>
    %c0_37 = arith.constant 0 : index
    %c0_38 = arith.constant 0 : index
    %52 = vector.load %arg13[%c0_37, %c0_38] : memref<1x64xf32, #tpu.memory_space<vmem>>, vector<1x64xf32>
    %cst_39 = arith.constant dense<0.000000e+00> : vector<200x64xf32>
    %53 = tpu.matmul %50, %51, %cst_39 {dimension_numbers = #tpu.dot_dimension_numbers<[1], [0], [0], [1], [0, 0, 1, 1], [], []>} : vector<200x48xf32>, vector<48x64xf32>, vector<200x64xf32> -> vector<200x64xf32>
    %54 = vector.broadcast %52 : vector<1x64xf32> to vector<200x64xf32>
    %55 = arith.addf %53, %54 : vector<200x64xf32>
    %cst_40 = arith.constant 0.000000e+00 : f32
    %56 = vector.broadcast %cst_40 : f32 to vector<200x64xf32>
    %57 = arith.cmpf ogt, %55, %56 : vector<200x64xf32>
    %cst_41 = arith.constant 0.00999999977 : f32
    %58 = vector.broadcast %cst_41 : f32 to vector<200x64xf32>
    %59 = arith.mulf %58, %55 : vector<200x64xf32>
    %60 = arith.select %57, %55, %59 : vector<200x64xi1>, vector<200x64xf32>
    %c0_42 = arith.constant 0 : index
    %c0_43 = arith.constant 0 : index
    %61 = vector.load %arg14[%c0_42, %c0_43] : memref<64x128xf32, #tpu.memory_space<vmem>>, vector<64x128xf32>
    %c0_44 = arith.constant 0 : index
    %c0_45 = arith.constant 0 : index
    %62 = vector.load %arg15[%c0_44, %c0_45] : memref<1x128xf32, #tpu.memory_space<vmem>>, vector<1x128xf32>
    %cst_46 = arith.constant dense<0.000000e+00> : vector<200x128xf32>
    %63 = tpu.matmul %60, %61, %cst_46 {dimension_numbers = #tpu.dot_dimension_numbers<[1], [0], [0], [1], [0, 0, 1, 1], [], []>} : vector<200x64xf32>, vector<64x128xf32>, vector<200x128xf32> -> vector<200x128xf32>
    %64 = vector.broadcast %62 : vector<1x128xf32> to vector<200x128xf32>
    %65 = arith.addf %63, %64 : vector<200x128xf32>
    %c0_47 = arith.constant 0 : index
    %c0_48 = arith.constant 0 : index
    %66 = vector.load %arg16[%c0_47, %c0_48] : memref<200x128xf32, #tpu.memory_space<vmem>>, vector<200x128xf32>
    tpu.vector_store %arg16[%c0_47, %c0_48], %65 {strides = array<i32>} : memref<200x128xf32, #tpu.memory_space<vmem>>, vector<200x128xf32>,
    return
  }
  func.func @transform_0(%arg0: i32) -> (i32, i32) {
    %c0_i32 = arith.constant 0 : i32
    %c0_i32_0 = arith.constant 0 : i32
    return %arg0, %c0_i32 : i32, i32
  }
  func.func @transform_1(%arg0: i32) -> (i32, i32) {
    %c0_i32 = arith.constant 0 : i32
    %c0_i32_0 = arith.constant 0 : i32
    %c0_i32_1 = arith.constant 0 : i32
    return %c0_i32, %c0_i32_0 : i32, i32
  }
  func.func @transform_2(%arg0: i32) -> (i32, i32) {
    %c0_i32 = arith.constant 0 : i32
    %c0_i32_0 = arith.constant 0 : i32
    %c0_i32_1 = arith.constant 0 : i32
    return %c0_i32, %c0_i32_0 : i32, i32
  }
  func.func @transform_3(%arg0: i32) -> (i32, i32) {
    %c0_i32 = arith.constant 0 : i32
    %c0_i32_0 = arith.constant 0 : i32
    %c0_i32_1 = arith.constant 0 : i32
    return %c0_i32, %c0_i32_0 : i32, i32
  }
  func.func @transform_4(%arg0: i32) -> (i32, i32) {
    %c0_i32 = arith.constant 0 : i32
    %c0_i32_0 = arith.constant 0 : i32
    %c0_i32_1 = arith.constant 0 : i32
    return %c0_i32, %c0_i32_0 : i32, i32
  }
  func.func @transform_5(%arg0: i32) -> (i32, i32) {
    %c0_i32 = arith.constant 0 : i32
    %c0_i32_0 = arith.constant 0 : i32
    %c0_i32_1 = arith.constant 0 : i32
    return %c0_i32, %c0_i32_0 : i32, i32
  }
  func.func @transform_6(%arg0: i32) -> (i32, i32) {
    %c0_i32 = arith.constant 0 : i32
    %c0_i32_0 = arith.constant 0 : i32
    %c0_i32_1 = arith.constant 0 : i32
    return %c0_i32, %c0_i32_0 : i32, i32
  }
  func.func @transform_7(%arg0: i32) -> (i32, i32) {
    %c0_i32 = arith.constant 0 : i32
    %c0_i32_0 = arith.constant 0 : i32
    %c0_i32_1 = arith.constant 0 : i32
    return %c0_i32, %c0_i32_0 : i32, i32
  }
  func.func @transform_8(%arg0: i32) -> (i32, i32) {
    %c0_i32 = arith.constant 0 : i32
    %c0_i32_0 = arith.constant 0 : i32
    %c0_i32_1 = arith.constant 0 : i32
    return %c0_i32, %c0_i32_0 : i32, i32
  }
  func.func @transform_9(%arg0: i32) -> (i32, i32) {
    %c0_i32 = arith.constant 0 : i32
    %c0_i32_0 = arith.constant 0 : i32
    %c0_i32_1 = arith.constant 0 : i32
    return %c0_i32, %c0_i32_0 : i32, i32
  }
  func.func @transform_10(%arg0: i32) -> (i32, i32) {
    %c0_i32 = arith.constant 0 : i32
    %c0_i32_0 = arith.constant 0 : i32
    %c0_i32_1 = arith.constant 0 : i32
    return %c0_i32, %c0_i32_0 : i32, i32
  }
  func.func @transform_11(%arg0: i32) -> (i32, i32) {
    %c0_i32 = arith.constant 0 : i32
    %c0_i32_0 = arith.constant 0 : i32
    %c0_i32_1 = arith.constant 0 : i32
    return %c0_i32, %c0_i32_0 : i32, i32
  }
  func.func @transform_12(%arg0: i32) -> (i32, i32) {
    %c0_i32 = arith.constant 0 : i32
    %c0_i32_0 = arith.constant 0 : i32
    %c0_i32_1 = arith.constant 0 : i32
    return %c0_i32, %c0_i32_0 : i32, i32
  }
  func.func @transform_13(%arg0: i32) -> (i32, i32) {
    %c0_i32 = arith.constant 0 : i32
    %c0_i32_0 = arith.constant 0 : i32
    %c0_i32_1 = arith.constant 0 : i32
    return %c0_i32, %c0_i32_0 : i32, i32
  }
  func.func @transform_14(%arg0: i32) -> (i32, i32) {
    %c0_i32 = arith.constant 0 : i32
    %c0_i32_0 = arith.constant 0 : i32
    %c0_i32_1 = arith.constant 0 : i32
    return %c0_i32, %c0_i32_0 : i32, i32
  }
  func.func @transform_15(%arg0: i32) -> (i32, i32) {
    %c0_i32 = arith.constant 0 : i32
    %c0_i32_0 = arith.constant 0 : i32
    return %arg0, %c0_i32 : i32, i32
  }
}

</mosaic_0001>

<llo_original>
// kernel: autoencoder_forward.1
$region0: #{autoencoder_forward.1}
  #allocation0 [shape = 'u32[]', space=smem, size = 0x4, offset = 0x4, fixed_abs, tag = 'smem constant byte address 0x4 - core index']
  #allocation1 [shape = 'u32[72,128]{1,0:T(1,128)}', space=vmem, size = 0x9000, scoped, tag = 'internal scratch']
  %s0 = inlined_call_operand.vmem [shape: f32[200,32], index: 0, kind: input, shape index: {}]
  %s1 = inlined_call_operand.vmem [shape: f32[32,64], index: 1, kind: input, shape index: {}]
  %s2 = inlined_call_operand.vmem [shape: f32[1,64], index: 2, kind: input, shape index: {}]
  %s3 = inlined_call_operand.vmem [shape: f32[64,48], index: 3, kind: input, shape index: {}]
  %s4 = inlined_call_operand.vmem [shape: f32[1,48], index: 4, kind: input, shape index: {}]
  %s5 = inlined_call_operand.vmem [shape: f32[48,40], index: 5, kind: input, shape index: {}]
  %s6 = inlined_call_operand.vmem [shape: f32[1,40], index: 6, kind: input, shape index: {}]
  %s7 = inlined_call_operand.vmem [shape: f32[40,40], index: 7, kind: input, shape index: {}]
  %s8 = inlined_call_operand.vmem [shape: f32[1,40], index: 8, kind: input, shape index: {}]
  %s9 = inlined_call_operand.vmem [shape: f32[40,48], index: 9, kind: input, shape index: {}]
  %s10 = inlined_call_operand.vmem [shape: f32[1,48], index: 10, kind: input, shape index: {}]
  %s11 = inlined_call_operand.vmem [shape: f32[48,64], index: 11, kind: input, shape index: {}]
  %s12 = inlined_call_operand.vmem [shape: f32[1,64], index: 12, kind: input, shape index: {}]
  %s13 = inlined_call_operand.vmem [shape: f32[64,128], index: 13, kind: input, shape index: {}]
  %s14 = inlined_call_operand.vmem [shape: f32[1,128], index: 14, kind: input, shape index: {}]
  %s15 = inlined_call_operand.hbm [shape: f32[200,128], index: 15, kind: output, shape index: {}]
  %s16 = sld [smem:[#allocation0]]
  $region70: #{autoencoder_forward.1} parent=0
    _
  %s18 = ssub.s32 1, %s16
  %s19 = scalar_select 0, %s18, %s16
  $region1: #{autoencoder_forward.1} parent=0
    #allocation2 [shape = 'u8[102400]{0}', space=vmem, size = 0x19000, scoped, tag = 'output window, operand 0, single buffered']
    #allocation3 [shape = 's32[1]{0}', space=sflag, size = 0x4, scoped, tag = 'scoped memory for autoencoder_forward.1']
    %20 = vsyncpa [#allocation3], 0
    // Predicated region
    $region2: #{autoencoder_forward.1} parent=1 // pred_check
      _
    $region3: #{autoencoder_forward.1} parent=1 // pred_check_branch
      %22 = sbr.rel (0) target = $region5
    $region4: #{autoencoder_forward.1} parent=1 // pred_region
      _
    $region5: #{autoencoder_forward.1} parent=1 // pred_fallthru
      _
    // Predicated region
    $region6: #{autoencoder_forward.1} parent=1 // pred_check
      _
    $region7: #{autoencoder_forward.1} parent=1 // pred_check_branch
      %24 = sbr.rel (0) target = $region9
    $region8: #{autoencoder_forward.1} parent=1 // pred_region
      _
    $region9: #{autoencoder_forward.1} parent=1 // pred_fallthru
      _
    // Predicated region
    $region10: #{autoencoder_forward.1} parent=1 // pred_check
      _
    $region11: #{autoencoder_forward.1} parent=1 // pred_check_branch
      %26 = sbr.rel (0) target = $region13
    $region12: #{autoencoder_forward.1} parent=1 // pred_region
      _
    $region13: #{autoencoder_forward.1} parent=1 // pred_fallthru
      _
    // Predicated region
    $region14: #{autoencoder_forward.1} parent=1 // pred_check
      _
    $region15: #{autoencoder_forward.1} parent=1 // pred_check_branch
      %28 = sbr.rel (0) target = $region17
    $region16: #{autoencoder_forward.1} parent=1 // pred_region
      _
    $region17: #{autoencoder_forward.1} parent=1 // pred_fallthru
      _
    // Predicated region
    $region18: #{autoencoder_forward.1} parent=1 // pred_check
      _
    $region19: #{autoencoder_forward.1} parent=1 // pred_check_branch
      %30 = sbr.rel (0) target = $region21
    $region20: #{autoencoder_forward.1} parent=1 // pred_region
      _
    $region21: #{autoencoder_forward.1} parent=1 // pred_fallthru
      _
    // Predicated region
    $region22: #{autoencoder_forward.1} parent=1 // pred_check
      _
    $region23: #{autoencoder_forward.1} parent=1 // pred_check_branch
      %32 = sbr.rel (0) target = $region25
    $region24: #{autoencoder_forward.1} parent=1 // pred_region
      _
    $region25: #{autoencoder_forward.1} parent=1 // pred_fallthru
      _
    // Predicated region
    $region26: #{autoencoder_forward.1} parent=1 // pred_check
      _
    $region27: #{autoencoder_forward.1} parent=1 // pred_check_branch
      %34 = sbr.rel (0) target = $region29
    $region28: #{autoencoder_forward.1} parent=1 // pred_region
      _
    $region29: #{autoencoder_forward.1} parent=1 // pred_fallthru
      _
    // Predicated region
    $region30: #{autoencoder_forward.1} parent=1 // pred_check
      _
    $region31: #{autoencoder_forward.1} parent=1 // pred_check_branch
      %36 = sbr.rel (0) target = $region33
    $region32: #{autoencoder_forward.1} parent=1 // pred_region
      _
    $region33: #{autoencoder_forward.1} parent=1 // pred_fallthru
      _
    // Predicated region
    $region34: #{autoencoder_forward.1} parent=1 // pred_check
      _
    $region35: #{autoencoder_forward.1} parent=1 // pred_check_branch
      %38 = sbr.rel (0) target = $region37
    $region36: #{autoencoder_forward.1} parent=1 // pred_region
      _
    $region37: #{autoencoder_forward.1} parent=1 // pred_fallthru
      _
    // Predicated region
    $region38: #{autoencoder_forward.1} parent=1 // pred_check
      _
    $region39: #{autoencoder_forward.1} parent=1 // pred_check_branch
      %40 = sbr.rel (0) target = $region41
    $region40: #{autoencoder_forward.1} parent=1 // pred_region
      _
    $region41: #{autoencoder_forward.1} parent=1 // pred_fallthru
      _
    // Predicated region
    $region42: #{autoencoder_forward.1} parent=1 // pred_check
      _
    $region43: #{autoencoder_forward.1} parent=1 // pred_check_branch
      %42 = sbr.rel (0) target = $region45
    $region44: #{autoencoder_forward.1} parent=1 // pred_region
      _
    $region45: #{autoencoder_forward.1} parent=1 // pred_fallthru
      _
    // Predicated region
    $region46: #{autoencoder_forward.1} parent=1 // pred_check
      _
    $region47: #{autoencoder_forward.1} parent=1 // pred_check_branch
      %44 = sbr.rel (0) target = $region49
    $region48: #{autoencoder_forward.1} parent=1 // pred_region
      _
    $region49: #{autoencoder_forward.1} parent=1 // pred_fallthru
      _
    // Predicated region
    $region50: #{autoencoder_forward.1} parent=1 // pred_check
      _
    $region51: #{autoencoder_forward.1} parent=1 // pred_check_branch
      %46 = sbr.rel (0) target = $region53
    $region52: #{autoencoder_forward.1} parent=1 // pred_region
      _
    $region53: #{autoencoder_forward.1} parent=1 // pred_fallthru
      _
    // Predicated region
    $region54: #{autoencoder_forward.1} parent=1 // pred_check
      _
    $region55: #{autoencoder_forward.1} parent=1 // pred_check_branch
      %48 = sbr.rel (0) target = $region57
    $region56: #{autoencoder_forward.1} parent=1 // pred_region
      _
    $region57: #{autoencoder_forward.1} parent=1 // pred_fallthru
      _
    // Predicated region
    $region58: #{autoencoder_forward.1} parent=1 // pred_check
      _
    $region59: #{autoencoder_forward.1} parent=1 // pred_check_branch
      %50 = sbr.rel (0) target = $region61
    $region60: #{autoencoder_forward.1} parent=1 // pred_region
      _
    $region61: #{autoencoder_forward.1} parent=1 // pred_fallthru
      _
    %v51 = vld [vmem:[%s0] sm:$0xff]
    %v52 = vld [vmem:[%s0 + $0x8] sm:$0xff]
    %v53 = vld [vmem:[%s0 + $0x10] sm:$0xff]
    %v54 = vld [vmem:[%s0 + $0x18] sm:$0xff]
    %v55 = vld [vmem:[%s0 + $0x20] sm:$0xff]
    %v56 = vld [vmem:[%s0 + $0x28] sm:$0xff]
    %v57 = vld [vmem:[%s0 + $0x30] sm:$0xff]
    %v58 = vld [vmem:[%s0 + $0x38] sm:$0xff]
    %v59 = vld [vmem:[%s0 + $0x40] sm:$0xff]
    %v60 = vld [vmem:[%s0 + $0x48] sm:$0xff]
    %v61 = vld [vmem:[%s0 + $0x50] sm:$0xff]
    %v62 = vld [vmem:[%s0 + $0x58] sm:$0xff]
    %v63 = vld [vmem:[%s0 + $0x60] sm:$0xff]
    %v64 = vld [vmem:[%s0 + $0x68] sm:$0xff]
    %v65 = vld [vmem:[%s0 + $0x70] sm:$0xff]
    %v66 = vld [vmem:[%s0 + $0x78] sm:$0xff]
    %v67 = vld [vmem:[%s0 + $0x80] sm:$0xff]
    %v68 = vld [vmem:[%s0 + $0x88] sm:$0xff]
    %v69 = vld [vmem:[%s0 + $0x90] sm:$0xff]
    %v70 = vld [vmem:[%s0 + $0x98] sm:$0xff]
    %v71 = vld [vmem:[%s0 + $0xa0] sm:$0xff]
    %v72 = vld [vmem:[%s0 + $0xa8] sm:$0xff]
    %v73 = vld [vmem:[%s0 + $0xb0] sm:$0xff]
    %v74 = vld [vmem:[%s0 + $0xb8] sm:$0xff]
    %v75 = vld [vmem:[%s0 + $0xc0] sm:$0xff]
    %v76 = vld [vmem:[%s1] sm:$0xff]
    %v77 = vld [vmem:[%s1 + $0x8] sm:$0xff]
    %v78 = vld [vmem:[%s1 + $0x10] sm:$0xff]
    %v79 = vld [vmem:[%s1 + $0x18] sm:$0xff]
    %v80 = vld [vmem:[%s2] sm:$0x1]
    %v82 = vperm.slane %v80, 0
    %vm84 = vcmask 261120
    %v86 = vsel %vm84, %v51, 0
    %v89 = vsel %vm84, %v52, 0
    %v92 = vsel %vm84, %v53, 0
    %v95 = vsel %vm84, %v54, 0
    %v98 = vsel %vm84, %v55, 0
    %v101 = vsel %vm84, %v56, 0
    %v104 = vsel %vm84, %v57, 0
    %v107 = vsel %vm84, %v58, 0
    %v110 = vsel %vm84, %v59, 0
    %v113 = vsel %vm84, %v60, 0
    %v116 = vsel %vm84, %v61, 0
    %v119 = vsel %vm84, %v62, 0
    %v122 = vsel %vm84, %v63, 0
    %v125 = vsel %vm84, %v64, 0
    %v128 = vsel %vm84, %v65, 0
    %v131 = vsel %vm84, %v66, 0
    %v134 = vsel %vm84, %v67, 0
    %v137 = vsel %vm84, %v68, 0
    %v140 = vsel %vm84, %v69, 0
    %v143 = vsel %vm84, %v70, 0
    %v146 = vsel %vm84, %v71, 0
    %v149 = vsel %vm84, %v72, 0
    %v152 = vsel %vm84, %v73, 0
    %v155 = vsel %vm84, %v74, 0
    %v158 = vsel %vm84, %v75, 0
    %160 = vmatpush.msra.mxu0 0.0
    %161 = vmatpush.msra.mxu0 0.0
    %162 = vmatpush.msra.mxu0 0.0
    %163 = vmatpush.msra.mxu0 0.0
    %164 = vmatpush.msra.mxu0 0.0
    %165 = vmatpush.msra.mxu0 0.0
    %166 = vmatpush.msra.mxu0 0.0
    %167 = vmatpush.msra.mxu0 0.0
    %168 = vmatpush.msra.mxu0 0.0
    %169 = vmatpush.msra.mxu0 0.0
    %170 = vmatpush.msra.mxu0 0.0
    %171 = vmatpush.msra.mxu0 0.0
    %172 = vmatpush.msra.mxu0 %v79
    %173 = vmatpush.msra.mxu0 %v78
    %174 = vmatpush.msra.mxu0 %v77
    %175 = vmatpush.msra.mxu0 %v76
    %176 = vmatmul.f32.gmra.mxu0 %v86
    %v177 = vpop.f32.mrf.mxu0
    %v178 = vadd.f32 %v82, %v177
    %179 = vmatmul.f32.gmra.mxu0 %v89
    %v180 = vpop.f32.mrf.mxu0
    %v181 = vadd.f32 %v82, %v180
    %182 = vmatmul.f32.gmra.mxu0 %v92
    %v183 = vpop.f32.mrf.mxu0
    %v184 = vadd.f32 %v82, %v183
    %185 = vmatmul.f32.gmra.mxu0 %v95
    %v186 = vpop.f32.mrf.mxu0
    %v187 = vadd.f32 %v82, %v186
    %188 = vmatmul.f32.gmra.mxu0 %v98
    %v189 = vpop.f32.mrf.mxu0
    %v190 = vadd.f32 %v82, %v189
    %191 = vmatmul.f32.gmra.mxu0 %v101
    %v192 = vpop.f32.mrf.mxu0
    %v193 = vadd.f32 %v82, %v192
    %194 = vmatmul.f32.gmra.mxu0 %v104
    %v195 = vpop.f32.mrf.mxu0
    %v196 = vadd.f32 %v82, %v195
    %197 = vmatmul.f32.gmra.mxu0 %v107
    %v198 = vpop.f32.mrf.mxu0
    %v199 = vadd.f32 %v82, %v198
    %200 = vmatmul.f32.gmra.mxu0 %v110
    %v201 = vpop.f32.mrf.mxu0
    %v202 = vadd.f32 %v82, %v201
    %203 = vmatmul.f32.gmra.mxu0 %v113
    %v204 = vpop.f32.mrf.mxu0
    %v205 = vadd.f32 %v82, %v204
    %206 = vmatmul.f32.gmra.mxu0 %v116
    %v207 = vpop.f32.mrf.mxu0
    %v208 = vadd.f32 %v82, %v207
    %209 = vmatmul.f32.gmra.mxu0 %v119
    %v210 = vpop.f32.mrf.mxu0
    %v211 = vadd.f32 %v82, %v210
    %212 = vmatmul.f32.gmra.mxu0 %v122
    %v213 = vpop.f32.mrf.mxu0
    %v214 = vadd.f32 %v82, %v213
    %215 = vmatmul.f32.gmra.mxu0 %v125
    %v216 = vpop.f32.mrf.mxu0
    %v217 = vadd.f32 %v82, %v216
    %218 = vmatmul.f32.gmra.mxu0 %v128
    %v219 = vpop.f32.mrf.mxu0
    %v220 = vadd.f32 %v82, %v219
    %221 = vmatmul.f32.gmra.mxu0 %v131
    %v222 = vpop.f32.mrf.mxu0
    %v223 = vadd.f32 %v82, %v222
    %224 = vmatmul.f32.gmra.mxu0 %v134
    %v225 = vpop.f32.mrf.mxu0
    %v226 = vadd.f32 %v82, %v225
    %227 = vmatmul.f32.gmra.mxu0 %v137
    %v228 = vpop.f32.mrf.mxu0
    %v229 = vadd.f32 %v82, %v228
    %230 = vmatmul.f32.gmra.mxu0 %v140
    %v231 = vpop.f32.mrf.mxu0
    %v232 = vadd.f32 %v82, %v231
    %233 = vmatmul.f32.gmra.mxu0 %v143
    %v234 = vpop.f32.mrf.mxu0
    %v235 = vadd.f32 %v82, %v234
    %236 = vmatmul.f32.gmra.mxu0 %v146
    %v237 = vpop.f32.mrf.mxu0
    %v238 = vadd.f32 %v82, %v237
    %239 = vmatmul.f32.gmra.mxu0 %v149
    %v240 = vpop.f32.mrf.mxu0
    %v241 = vadd.f32 %v82, %v240
    %242 = vmatmul.f32.gmra.mxu0 %v152
    %v243 = vpop.f32.mrf.mxu0
    %v244 = vadd.f32 %v82, %v243
    %245 = vmatmul.f32.gmra.mxu0 %v155
    %v246 = vpop.f32.mrf.mxu0
    %v247 = vadd.f32 %v82, %v246
    %248 = vmatmul.f32.gmra.mxu0 %v158
    %v249 = vpop.f32.mrf.mxu0
    %v250 = vadd.f32 %v82, %v249
    %251 = vdwg.mxu0
    %vm252 = vcmp.gt.f32.partialorder %v178, 0.0
    %vm253 = vcmp.gt.f32.partialorder %v181, 0.0
    %vm254 = vcmp.gt.f32.partialorder %v184, 0.0
    %vm255 = vcmp.gt.f32.partialorder %v187, 0.0
    %vm256 = vcmp.gt.f32.partialorder %v190, 0.0
    %vm257 = vcmp.gt.f32.partialorder %v193, 0.0
    %vm258 = vcmp.gt.f32.partialorder %v196, 0.0
    %vm259 = vcmp.gt.f32.partialorder %v199, 0.0
    %vm260 = vcmp.gt.f32.partialorder %v202, 0.0
    %vm261 = vcmp.gt.f32.partialorder %v205, 0.0
    %vm262 = vcmp.gt.f32.partialorder %v208, 0.0
    %vm263 = vcmp.gt.f32.partialorder %v211, 0.0
    %vm264 = vcmp.gt.f32.partialorder %v214, 0.0
    %vm265 = vcmp.gt.f32.partialorder %v217, 0.0
    %vm266 = vcmp.gt.f32.partialorder %v220, 0.0
    %vm267 = vcmp.gt.f32.partialorder %v223, 0.0
    %vm268 = vcmp.gt.f32.partialorder %v226, 0.0
    %vm269 = vcmp.gt.f32.partialorder %v229, 0.0
    %vm270 = vcmp.gt.f32.partialorder %v232, 0.0
    %vm271 = vcmp.gt.f32.partialorder %v235, 0.0
    %vm272 = vcmp.gt.f32.partialorder %v238, 0.0
    %vm273 = vcmp.gt.f32.partialorder %v241, 0.0
    %vm274 = vcmp.gt.f32.partialorder %v244, 0.0
    %vm275 = vcmp.gt.f32.partialorder %v247, 0.0
    %vm276 = vcmp.gt.f32.partialorder %v250, 0.0
    %v277 = vmul.f32 %v178, 0.01
    %v278 = vmul.f32 %v181, 0.01
    %v279 = vmul.f32 %v184, 0.01
    %v280 = vmul.f32 %v187, 0.01
    %v281 = vmul.f32 %v190, 0.01
    %v282 = vmul.f32 %v193, 0.01
    %v283 = vmul.f32 %v196, 0.01
    %v284 = vmul.f32 %v199, 0.01
    %v285 = vmul.f32 %v202, 0.01
    %v286 = vmul.f32 %v205, 0.01
    %v287 = vmul.f32 %v208, 0.01
    %v288 = vmul.f32 %v211, 0.01
    %v289 = vmul.f32 %v214, 0.01
    %v290 = vmul.f32 %v217, 0.01
    %v291 = vmul.f32 %v220, 0.01
    %v292 = vmul.f32 %v223, 0.01
    %v293 = vmul.f32 %v226, 0.01
    %v294 = vmul.f32 %v229, 0.01
    %v295 = vmul.f32 %v232, 0.01
    %v296 = vmul.f32 %v235, 0.01
    %v297 = vmul.f32 %v238, 0.01
    %v298 = vmul.f32 %v241, 0.01
    %v299 = vmul.f32 %v244, 0.01
    %v300 = vmul.f32 %v247, 0.01
    %v301 = vmul.f32 %v250, 0.01
    %v302 = vsel %vm252, %v178, %v277
    %v303 = vsel %vm253, %v181, %v278
    %v304 = vsel %vm254, %v184, %v279
    %v305 = vsel %vm255, %v187, %v280
    %v306 = vsel %vm256, %v190, %v281
    %v307 = vsel %vm257, %v193, %v282
    %v308 = vsel %vm258, %v196, %v283
    %v309 = vsel %vm259, %v199, %v284
    %v310 = vsel %vm260, %v202, %v285
    %v311 = vsel %vm261, %v205, %v286
    %v312 = vsel %vm262, %v208, %v287
    %v313 = vsel %vm263, %v211, %v288
    %v314 = vsel %vm264, %v214, %v289
    %v315 = vsel %vm265, %v217, %v290
    %v316 = vsel %vm266, %v220, %v291
    %v317 = vsel %vm267, %v223, %v292
    %v318 = vsel %vm268, %v226, %v293
    %v319 = vsel %vm269, %v229, %v294
    %v320 = vsel %vm270, %v232, %v295
    %v321 = vsel %vm271, %v235, %v296
    %v322 = vsel %vm272, %v238, %v297
    %v323 = vsel %vm273, %v241, %v298
    %v324 = vsel %vm274, %v244, %v299
    %v325 = vsel %vm275, %v247, %v300
    %v326 = vsel %vm276, %v250, %v301
    %v327 = vld [vmem:[%s3] sm:$0xff]
    %v328 = vld [vmem:[%s3 + $0x8] sm:$0xff]
    %v329 = vld [vmem:[%s3 + $0x10] sm:$0xff]
    %v330 = vld [vmem:[%s3 + $0x18] sm:$0xff]
    %v331 = vld [vmem:[%s3 + $0x20] sm:$0xff]
    %v332 = vld [vmem:[%s3 + $0x28] sm:$0xff]
    %v333 = vld [vmem:[%s3 + $0x30] sm:$0xff]
    %v334 = vld [vmem:[%s3 + $0x38] sm:$0xff]
    %v335 = vld [vmem:[%s4] sm:$0x1]
    %v337 = vperm.slane %v335, 0
    %vm339 = vcmask 523264
    %v341 = vsel %vm339, %v302, 0
    %v344 = vsel %vm339, %v303, 0
    %v347 = vsel %vm339, %v304, 0
    %v350 = vsel %vm339, %v305, 0
    %v353 = vsel %vm339, %v306, 0
    %v356 = vsel %vm339, %v307, 0
    %v359 = vsel %vm339, %v308, 0
    %v362 = vsel %vm339, %v309, 0
    %v365 = vsel %vm339, %v310, 0
    %v368 = vsel %vm339, %v311, 0
    %v371 = vsel %vm339, %v312, 0
    %v374 = vsel %vm339, %v313, 0
    %v377 = vsel %vm339, %v314, 0
    %v380 = vsel %vm339, %v315, 0
    %v383 = vsel %vm339, %v316, 0
    %v386 = vsel %vm339, %v317, 0
    %v389 = vsel %vm339, %v318, 0
    %v392 = vsel %vm339, %v319, 0
    %v395 = vsel %vm339, %v320, 0
    %v398 = vsel %vm339, %v321, 0
    %v401 = vsel %vm339, %v322, 0
    %v404 = vsel %vm339, %v323, 0
    %v407 = vsel %vm339, %v324, 0
    %v410 = vsel %vm339, %v325, 0
    %v413 = vsel %vm339, %v326, 0
    %415 = vmatpush.msra.mxu0 0.0
    %416 = vmatpush.msra.mxu0 0.0
    %417 = vmatpush.msra.mxu0 0.0
    %418 = vmatpush.msra.mxu0 0.0
    %419 = vmatpush.msra.mxu0 0.0
    %420 = vmatpush.msra.mxu0 0.0
    %421 = vmatpush.msra.mxu0 0.0
    %422 = vmatpush.msra.mxu0 0.0
    %423 = vmatpush.msra.mxu0 %v334
    %424 = vmatpush.msra.mxu0 %v333
    %425 = vmatpush.msra.mxu0 %v332
    %426 = vmatpush.msra.mxu0 %v331
    %427 = vmatpush.msra.mxu0 %v330
    %428 = vmatpush.msra.mxu0 %v329
    %429 = vmatpush.msra.mxu0 %v328
    %430 = vmatpush.msra.mxu0 %v327
    %431 = vmatmul.f32.gmra.mxu0 %v341
    %v432 = vpop.f32.mrf.mxu0
    %v433 = vadd.f32 %v337, %v432
    %434 = vmatmul.f32.gmra.mxu0 %v344
    %v435 = vpop.f32.mrf.mxu0
    %v436 = vadd.f32 %v337, %v435
    %437 = vmatmul.f32.gmra.mxu0 %v347
    %v438 = vpop.f32.mrf.mxu0
    %v439 = vadd.f32 %v337, %v438
    %440 = vmatmul.f32.gmra.mxu0 %v350
    %v441 = vpop.f32.mrf.mxu0
    %v442 = vadd.f32 %v337, %v441
    %443 = vmatmul.f32.gmra.mxu0 %v353
    %v444 = vpop.f32.mrf.mxu0
    %v445 = vadd.f32 %v337, %v444
    %446 = vmatmul.f32.gmra.mxu0 %v356
    %v447 = vpop.f32.mrf.mxu0
    %v448 = vadd.f32 %v337, %v447
    %449 = vmatmul.f32.gmra.mxu0 %v359
    %v450 = vpop.f32.mrf.mxu0
    %v451 = vadd.f32 %v337, %v450
    %452 = vmatmul.f32.gmra.mxu0 %v362
    %v453 = vpop.f32.mrf.mxu0
    %v454 = vadd.f32 %v337, %v453
    %455 = vmatmul.f32.gmra.mxu0 %v365
    %v456 = vpop.f32.mrf.mxu0
    %v457 = vadd.f32 %v337, %v456
    %458 = vmatmul.f32.gmra.mxu0 %v368
    %v459 = vpop.f32.mrf.mxu0
    %v460 = vadd.f32 %v337, %v459
    %461 = vmatmul.f32.gmra.mxu0 %v371
    %v462 = vpop.f32.mrf.mxu0
    %v463 = vadd.f32 %v337, %v462
    %464 = vmatmul.f32.gmra.mxu0 %v374
    %v465 = vpop.f32.mrf.mxu0
    %v466 = vadd.f32 %v337, %v465
    %467 = vmatmul.f32.gmra.mxu0 %v377
    %v468 = vpop.f32.mrf.mxu0
    %v469 = vadd.f32 %v337, %v468
    %470 = vmatmul.f32.gmra.mxu0 %v380
    %v471 = vpop.f32.mrf.mxu0
    %v472 = vadd.f32 %v337, %v471
    %473 = vmatmul.f32.gmra.mxu0 %v383
    %v474 = vpop.f32.mrf.mxu0
    %v475 = vadd.f32 %v337, %v474
    %476 = vmatmul.f32.gmra.mxu0 %v386
    %v477 = vpop.f32.mrf.mxu0
    %v478 = vadd.f32 %v337, %v477
    %479 = vmatmul.f32.gmra.mxu0 %v389
    %v480 = vpop.f32.mrf.mxu0
    %v481 = vadd.f32 %v337, %v480
    %482 = vmatmul.f32.gmra.mxu0 %v392
    %v483 = vpop.f32.mrf.mxu0
    %v484 = vadd.f32 %v337, %v483
    %485 = vmatmul.f32.gmra.mxu0 %v395
    %v486 = vpop.f32.mrf.mxu0
    %v487 = vadd.f32 %v337, %v486
    %488 = vmatmul.f32.gmra.mxu0 %v398
    %v489 = vpop.f32.mrf.mxu0
    %v490 = vadd.f32 %v337, %v489
    %491 = vmatmul.f32.gmra.mxu0 %v401
    %v492 = vpop.f32.mrf.mxu0
    %v493 = vadd.f32 %v337, %v492
    %494 = vmatmul.f32.gmra.mxu0 %v404
    %v495 = vpop.f32.mrf.mxu0
    %v496 = vadd.f32 %v337, %v495
    %497 = vmatmul.f32.gmra.mxu0 %v407
    %v498 = vpop.f32.mrf.mxu0
    %v499 = vadd.f32 %v337, %v498
    %500 = vmatmul.f32.gmra.mxu0 %v410
    %v501 = vpop.f32.mrf.mxu0
    %v502 = vadd.f32 %v337, %v501
    %503 = vmatmul.f32.gmra.mxu0 %v413
    %v504 = vpop.f32.mrf.mxu0
    %v505 = vadd.f32 %v337, %v504
    %506 = vdwg.mxu0
    %vm507 = vcmp.gt.f32.partialorder %v433, 0.0
    %vm508 = vcmp.gt.f32.partialorder %v436, 0.0
    %vm509 = vcmp.gt.f32.partialorder %v439, 0.0
    %vm510 = vcmp.gt.f32.partialorder %v442, 0.0
    %vm511 = vcmp.gt.f32.partialorder %v445, 0.0
    %vm512 = vcmp.gt.f32.partialorder %v448, 0.0
    %vm513 = vcmp.gt.f32.partialorder %v451, 0.0
    %vm514 = vcmp.gt.f32.partialorder %v454, 0.0
    %vm515 = vcmp.gt.f32.partialorder %v457, 0.0
    %vm516 = vcmp.gt.f32.partialorder %v460, 0.0
    %vm517 = vcmp.gt.f32.partialorder %v463, 0.0
    %vm518 = vcmp.gt.f32.partialorder %v466, 0.0
    %vm519 = vcmp.gt.f32.partialorder %v469, 0.0
    %vm520 = vcmp.gt.f32.partialorder %v472, 0.0
    %vm521 = vcmp.gt.f32.partialorder %v475, 0.0
    %vm522 = vcmp.gt.f32.partialorder %v478, 0.0
    %vm523 = vcmp.gt.f32.partialorder %v481, 0.0
    %vm524 = vcmp.gt.f32.partialorder %v484, 0.0
    %vm525 = vcmp.gt.f32.partialorder %v487, 0.0
    %vm526 = vcmp.gt.f32.partialorder %v490, 0.0
    %vm527 = vcmp.gt.f32.partialorder %v493, 0.0
    %vm528 = vcmp.gt.f32.partialorder %v496, 0.0
    %vm529 = vcmp.gt.f32.partialorder %v499, 0.0
    %vm530 = vcmp.gt.f32.partialorder %v502, 0.0
    %vm531 = vcmp.gt.f32.partialorder %v505, 0.0
    %v532 = vmul.f32 %v433, 0.01
    %v533 = vmul.f32 %v436, 0.01
    %v534 = vmul.f32 %v439, 0.01
    %v535 = vmul.f32 %v442, 0.01
    %v536 = vmul.f32 %v445, 0.01
    %v537 = vmul.f32 %v448, 0.01
    %v538 = vmul.f32 %v451, 0.01
    %v539 = vmul.f32 %v454, 0.01
    %v540 = vmul.f32 %v457, 0.01
    %v541 = vmul.f32 %v460, 0.01
    %v542 = vmul.f32 %v463, 0.01
    %v543 = vmul.f32 %v466, 0.01
    %v544 = vmul.f32 %v469, 0.01
    %v545 = vmul.f32 %v472, 0.01
    %v546 = vmul.f32 %v475, 0.01
    %v547 = vmul.f32 %v478, 0.01
    %v548 = vmul.f32 %v481, 0.01
    %v549 = vmul.f32 %v484, 0.01
    %v550 = vmul.f32 %v487, 0.01
    %v551 = vmul.f32 %v490, 0.01
    %v552 = vmul.f32 %v493, 0.01
    %v553 = vmul.f32 %v496, 0.01
    %v554 = vmul.f32 %v499, 0.01
    %v555 = vmul.f32 %v502, 0.01
    %v556 = vmul.f32 %v505, 0.01
    %v557 = vsel %vm507, %v433, %v532
    %v558 = vsel %vm508, %v436, %v533
    %v559 = vsel %vm509, %v439, %v534
    %v560 = vsel %vm510, %v442, %v535
    %v561 = vsel %vm511, %v445, %v536
    %v562 = vsel %vm512, %v448, %v537
    %v563 = vsel %vm513, %v451, %v538
    %v564 = vsel %vm514, %v454, %v539
    %v565 = vsel %vm515, %v457, %v540
    %v566 = vsel %vm516, %v460, %v541
    %v567 = vsel %vm517, %v463, %v542
    %v568 = vsel %vm518, %v466, %v543
    %v569 = vsel %vm519, %v469, %v544
    %v570 = vsel %vm520, %v472, %v545
    %v571 = vsel %vm521, %v475, %v546
    %v572 = vsel %vm522, %v478, %v547
    %v573 = vsel %vm523, %v481, %v548
    %v574 = vsel %vm524, %v484, %v549
    %v575 = vsel %vm525, %v487, %v550
    %v576 = vsel %vm526, %v490, %v551
    %v577 = vsel %vm527, %v493, %v552
    %v578 = vsel %vm528, %v496, %v553
    %v579 = vsel %vm529, %v499, %v554
    %v580 = vsel %vm530, %v502, %v555
    %v581 = vsel %vm531, %v505, %v556
    %v582 = vld [vmem:[%s5] sm:$0xff]
    %v583 = vld [vmem:[%s5 + $0x8] sm:$0xff]
    %v584 = vld [vmem:[%s5 + $0x10] sm:$0xff]
    %v585 = vld [vmem:[%s5 + $0x18] sm:$0xff]
    %v586 = vld [vmem:[%s5 + $0x20] sm:$0xff]
    %v587 = vld [vmem:[%s5 + $0x28] sm:$0xff]
    %v588 = vld [vmem:[%s6] sm:$0x1]
    %v590 = vperm.slane %v588, 0
    %vm592 = vcmask 392192
    %v594 = vsel %vm592, %v557, 0
    %v597 = vsel %vm592, %v558, 0
    %v600 = vsel %vm592, %v559, 0
    %v603 = vsel %vm592, %v560, 0
    %v606 = vsel %vm592, %v561, 0
    %v609 = vsel %vm592, %v562, 0
    %v612 = vsel %vm592, %v563, 0
    %v615 = vsel %vm592, %v564, 0
    %v618 = vsel %vm592, %v565, 0
    %v621 = vsel %vm592, %v566, 0
    %v624 = vsel %vm592, %v567, 0
    %v627 = vsel %vm592, %v568, 0
    %v630 = vsel %vm592, %v569, 0
    %v633 = vsel %vm592, %v570, 0
    %v636 = vsel %vm592, %v571, 0
    %v639 = vsel %vm592, %v572, 0
    %v642 = vsel %vm592, %v573, 0
    %v645 = vsel %vm592, %v574, 0
    %v648 = vsel %vm592, %v575, 0
    %v651 = vsel %vm592, %v576, 0
    %v654 = vsel %vm592, %v577, 0
    %v657 = vsel %vm592, %v578, 0
    %v660 = vsel %vm592, %v579, 0
    %v663 = vsel %vm592, %v580, 0
    %v666 = vsel %vm592, %v581, 0
    %668 = vmatpush.msra.mxu0 0.0
    %669 = vmatpush.msra.mxu0 0.0
    %670 = vmatpush.msra.mxu0 0.0
    %671 = vmatpush.msra.mxu0 0.0
    %672 = vmatpush.msra.mxu0 0.0
    %673 = vmatpush.msra.mxu0 0.0
    %674 = vmatpush.msra.mxu0 0.0
    %675 = vmatpush.msra.mxu0 0.0
    %676 = vmatpush.msra.mxu0 0.0
    %677 = vmatpush.msra.mxu0 0.0
    %678 = vmatpush.msra.mxu0 %v587
    %679 = vmatpush.msra.mxu0 %v586
    %680 = vmatpush.msra.mxu0 %v585
    %681 = vmatpush.msra.mxu0 %v584
    %682 = vmatpush.msra.mxu0 %v583
    %683 = vmatpush.msra.mxu0 %v582
    %684 = vmatmul.f32.gmra.mxu0 %v594
    %v685 = vpop.f32.mrf.mxu0
    %v686 = vadd.f32 %v590, %v685
    %687 = vmatmul.f32.gmra.mxu0 %v597
    %v688 = vpop.f32.mrf.mxu0
    %v689 = vadd.f32 %v590, %v688
    %690 = vmatmul.f32.gmra.mxu0 %v600
    %v691 = vpop.f32.mrf.mxu0
    %v692 = vadd.f32 %v590, %v691
    %693 = vmatmul.f32.gmra.mxu0 %v603
    %v694 = vpop.f32.mrf.mxu0
    %v695 = vadd.f32 %v590, %v694
    %696 = vmatmul.f32.gmra.mxu0 %v606
    %v697 = vpop.f32.mrf.mxu0
    %v698 = vadd.f32 %v590, %v697
    %699 = vmatmul.f32.gmra.mxu0 %v609
    %v700 = vpop.f32.mrf.mxu0
    %v701 = vadd.f32 %v590, %v700
    %702 = vmatmul.f32.gmra.mxu0 %v612
    %v703 = vpop.f32.mrf.mxu0
    %v704 = vadd.f32 %v590, %v703
    %705 = vmatmul.f32.gmra.mxu0 %v615
    %v706 = vpop.f32.mrf.mxu0
    %v707 = vadd.f32 %v590, %v706
    %708 = vmatmul.f32.gmra.mxu0 %v618
    %v709 = vpop.f32.mrf.mxu0
    %v710 = vadd.f32 %v590, %v709
    %711 = vmatmul.f32.gmra.mxu0 %v621
    %v712 = vpop.f32.mrf.mxu0
    %v713 = vadd.f32 %v590, %v712
    %714 = vmatmul.f32.gmra.mxu0 %v624
    %v715 = vpop.f32.mrf.mxu0
    %v716 = vadd.f32 %v590, %v715
    %717 = vmatmul.f32.gmra.mxu0 %v627
    %v718 = vpop.f32.mrf.mxu0
    %v719 = vadd.f32 %v590, %v718
    %720 = vmatmul.f32.gmra.mxu0 %v630
    %v721 = vpop.f32.mrf.mxu0
    %v722 = vadd.f32 %v590, %v721
    %723 = vmatmul.f32.gmra.mxu0 %v633
    %v724 = vpop.f32.mrf.mxu0
    %v725 = vadd.f32 %v590, %v724
    %726 = vmatmul.f32.gmra.mxu0 %v636
    %v727 = vpop.f32.mrf.mxu0
    %v728 = vadd.f32 %v590, %v727
    %729 = vmatmul.f32.gmra.mxu0 %v639
    %v730 = vpop.f32.mrf.mxu0
    %v731 = vadd.f32 %v590, %v730
    %732 = vmatmul.f32.gmra.mxu0 %v642
    %v733 = vpop.f32.mrf.mxu0
    %v734 = vadd.f32 %v590, %v733
    %735 = vmatmul.f32.gmra.mxu0 %v645
    %v736 = vpop.f32.mrf.mxu0
    %v737 = vadd.f32 %v590, %v736
    %738 = vmatmul.f32.gmra.mxu0 %v648
    %v739 = vpop.f32.mrf.mxu0
    %v740 = vadd.f32 %v590, %v739
    %741 = vmatmul.f32.gmra.mxu0 %v651
    %v742 = vpop.f32.mrf.mxu0
    %v743 = vadd.f32 %v590, %v742
    %744 = vmatmul.f32.gmra.mxu0 %v654
    %v745 = vpop.f32.mrf.mxu0
    %v746 = vadd.f32 %v590, %v745
    %747 = vmatmul.f32.gmra.mxu0 %v657
    %v748 = vpop.f32.mrf.mxu0
    %v749 = vadd.f32 %v590, %v748
    %750 = vmatmul.f32.gmra.mxu0 %v660
    %v751 = vpop.f32.mrf.mxu0
    %v752 = vadd.f32 %v590, %v751
    %753 = vmatmul.f32.gmra.mxu0 %v663
    %v754 = vpop.f32.mrf.mxu0
    %v755 = vadd.f32 %v590, %v754
    %756 = vmatmul.f32.gmra.mxu0 %v666
    %v757 = vpop.f32.mrf.mxu0
    %v758 = vadd.f32 %v590, %v757
    %759 = vdwg.mxu0
    %vm760 = vcmp.gt.f32.partialorder %v686, 0.0
    %vm761 = vcmp.gt.f32.partialorder %v689, 0.0
    %vm762 = vcmp.gt.f32.partialorder %v692, 0.0
    %vm763 = vcmp.gt.f32.partialorder %v695, 0.0
    %vm764 = vcmp.gt.f32.partialorder %v698, 0.0
    %vm765 = vcmp.gt.f32.partialorder %v701, 0.0
    %vm766 = vcmp.gt.f32.partialorder %v704, 0.0
    %vm767 = vcmp.gt.f32.partialorder %v707, 0.0
    %vm768 = vcmp.gt.f32.partialorder %v710, 0.0
    %vm769 = vcmp.gt.f32.partialorder %v713, 0.0
    %vm770 = vcmp.gt.f32.partialorder %v716, 0.0
    %vm771 = vcmp.gt.f32.partialorder %v719, 0.0
    %vm772 = vcmp.gt.f32.partialorder %v722, 0.0
    %vm773 = vcmp.gt.f32.partialorder %v725, 0.0
    %vm774 = vcmp.gt.f32.partialorder %v728, 0.0
    %vm775 = vcmp.gt.f32.partialorder %v731, 0.0
    %vm776 = vcmp.gt.f32.partialorder %v734, 0.0
    %vm777 = vcmp.gt.f32.partialorder %v737, 0.0
    %vm778 = vcmp.gt.f32.partialorder %v740, 0.0
    %vm779 = vcmp.gt.f32.partialorder %v743, 0.0
    %vm780 = vcmp.gt.f32.partialorder %v746, 0.0
    %vm781 = vcmp.gt.f32.partialorder %v749, 0.0
    %vm782 = vcmp.gt.f32.partialorder %v752, 0.0
    %vm783 = vcmp.gt.f32.partialorder %v755, 0.0
    %vm784 = vcmp.gt.f32.partialorder %v758, 0.0
    %v785 = vmul.f32 %v686, 0.01
    %v786 = vmul.f32 %v689, 0.01
    %v787 = vmul.f32 %v692, 0.01
    %v788 = vmul.f32 %v695, 0.01
    %v789 = vmul.f32 %v698, 0.01
    %v790 = vmul.f32 %v701, 0.01
    %v791 = vmul.f32 %v704, 0.01
    %v792 = vmul.f32 %v707, 0.01
    %v793 = vmul.f32 %v710, 0.01
    %v794 = vmul.f32 %v713, 0.01
    %v795 = vmul.f32 %v716, 0.01
    %v796 = vmul.f32 %v719, 0.01
    %v797 = vmul.f32 %v722, 0.01
    %v798 = vmul.f32 %v725, 0.01
    %v799 = vmul.f32 %v728, 0.01
    %v800 = vmul.f32 %v731, 0.01
    %v801 = vmul.f32 %v734, 0.01
    %v802 = vmul.f32 %v737, 0.01
    %v803 = vmul.f32 %v740, 0.01
    %v804 = vmul.f32 %v743, 0.01
    %v805 = vmul.f32 %v746, 0.01
    %v806 = vmul.f32 %v749, 0.01
    %v807 = vmul.f32 %v752, 0.01
    %v808 = vmul.f32 %v755, 0.01
    %v809 = vmul.f32 %v758, 0.01
    %v810 = vsel %vm760, %v686, %v785
    %v811 = vsel %vm761, %v689, %v786
    %v812 = vsel %vm762, %v692, %v787
    %v813 = vsel %vm763, %v695, %v788
    %v814 = vsel %vm764, %v698, %v789
    %v815 = vsel %vm765, %v701, %v790
    %v816 = vsel %vm766, %v704, %v791
    %v817 = vsel %vm767, %v707, %v792
    %v818 = vsel %vm768, %v710, %v793
    %v819 = vsel %vm769, %v713, %v794
    %v820 = vsel %vm770, %v716, %v795
    %v821 = vsel %vm771, %v719, %v796
    %v822 = vsel %vm772, %v722, %v797
    %v823 = vsel %vm773, %v725, %v798
    %v824 = vsel %vm774, %v728, %v799
    %v825 = vsel %vm775, %v731, %v800
    %v826 = vsel %vm776, %v734, %v801
    %v827 = vsel %vm777, %v737, %v802
    %v828 = vsel %vm778, %v740, %v803
    %v829 = vsel %vm779, %v743, %v804
    %v830 = vsel %vm780, %v746, %v805
    %v831 = vsel %vm781, %v749, %v806
    %v832 = vsel %vm782, %v752, %v807
    %v833 = vsel %vm783, %v755, %v808
    %v834 = vsel %vm784, %v758, %v809
    %v835 = vld [vmem:[%s7] sm:$0xff]
    %v836 = vld [vmem:[%s7 + $0x8] sm:$0xff]
    %v837 = vld [vmem:[%s7 + $0x10] sm:$0xff]
    %v838 = vld [vmem:[%s7 + $0x18] sm:$0xff]
    %v839 = vld [vmem:[%s7 + $0x20] sm:$0xff]
    %v840 = vld [vmem:[%s8] sm:$0x1]
    %v842 = vperm.slane %v840, 0
    %vm844 = vcmask 326656
    %v846 = vsel %vm844, %v810, 0
    %v849 = vsel %vm844, %v811, 0
    %v852 = vsel %vm844, %v812, 0
    %v855 = vsel %vm844, %v813, 0
    %v858 = vsel %vm844, %v814, 0
    %v861 = vsel %vm844, %v815, 0
    %v864 = vsel %vm844, %v816, 0
    %v867 = vsel %vm844, %v817, 0
    %v870 = vsel %vm844, %v818, 0
    %v873 = vsel %vm844, %v819, 0
    %v876 = vsel %vm844, %v820, 0
    %v879 = vsel %vm844, %v821, 0
    %v882 = vsel %vm844, %v822, 0
    %v885 = vsel %vm844, %v823, 0
    %v888 = vsel %vm844, %v824, 0
    %v891 = vsel %vm844, %v825, 0
    %v894 = vsel %vm844, %v826, 0
    %v897 = vsel %vm844, %v827, 0
    %v900 = vsel %vm844, %v828, 0
    %v903 = vsel %vm844, %v829, 0
    %v906 = vsel %vm844, %v830, 0
    %v909 = vsel %vm844, %v831, 0
    %v912 = vsel %vm844, %v832, 0
    %v915 = vsel %vm844, %v833, 0
    %v918 = vsel %vm844, %v834, 0
    %920 = vmatpush.msra.mxu0 0.0
    %921 = vmatpush.msra.mxu0 0.0
    %922 = vmatpush.msra.mxu0 0.0
    %923 = vmatpush.msra.mxu0 0.0
    %924 = vmatpush.msra.mxu0 0.0
    %925 = vmatpush.msra.mxu0 0.0
    %926 = vmatpush.msra.mxu0 0.0
    %927 = vmatpush.msra.mxu0 0.0
    %928 = vmatpush.msra.mxu0 0.0
    %929 = vmatpush.msra.mxu0 0.0
    %930 = vmatpush.msra.mxu0 0.0
    %931 = vmatpush.msra.mxu0 %v839
    %932 = vmatpush.msra.mxu0 %v838
    %933 = vmatpush.msra.mxu0 %v837
    %934 = vmatpush.msra.mxu0 %v836
    %935 = vmatpush.msra.mxu0 %v835
    %936 = vmatmul.f32.gmra.mxu0 %v846
    %v937 = vpop.f32.mrf.mxu0
    %v938 = vadd.f32 %v842, %v937
    %939 = vmatmul.f32.gmra.mxu0 %v849
    %v940 = vpop.f32.mrf.mxu0
    %v941 = vadd.f32 %v842, %v940
    %942 = vmatmul.f32.gmra.mxu0 %v852
    %v943 = vpop.f32.mrf.mxu0
    %v944 = vadd.f32 %v842, %v943
    %945 = vmatmul.f32.gmra.mxu0 %v855
    %v946 = vpop.f32.mrf.mxu0
    %v947 = vadd.f32 %v842, %v946
    %948 = vmatmul.f32.gmra.mxu0 %v858
    %v949 = vpop.f32.mrf.mxu0
    %v950 = vadd.f32 %v842, %v949
    %951 = vmatmul.f32.gmra.mxu0 %v861
    %v952 = vpop.f32.mrf.mxu0
    %v953 = vadd.f32 %v842, %v952
    %954 = vmatmul.f32.gmra.mxu0 %v864
    %v955 = vpop.f32.mrf.mxu0
    %v956 = vadd.f32 %v842, %v955
    %957 = vmatmul.f32.gmra.mxu0 %v867
    %v958 = vpop.f32.mrf.mxu0
    %v959 = vadd.f32 %v842, %v958
    %960 = vmatmul.f32.gmra.mxu0 %v870
    %v961 = vpop.f32.mrf.mxu0
    %v962 = vadd.f32 %v842, %v961
    %963 = vmatmul.f32.gmra.mxu0 %v873
    %v964 = vpop.f32.mrf.mxu0
    %v965 = vadd.f32 %v842, %v964
    %966 = vmatmul.f32.gmra.mxu0 %v876
    %v967 = vpop.f32.mrf.mxu0
    %v968 = vadd.f32 %v842, %v967
    %969 = vmatmul.f32.gmra.mxu0 %v879
    %v970 = vpop.f32.mrf.mxu0
    %v971 = vadd.f32 %v842, %v970
    %972 = vmatmul.f32.gmra.mxu0 %v882
    %v973 = vpop.f32.mrf.mxu0
    %v974 = vadd.f32 %v842, %v973
    %975 = vmatmul.f32.gmra.mxu0 %v885
    %v976 = vpop.f32.mrf.mxu0
    %v977 = vadd.f32 %v842, %v976
    %978 = vmatmul.f32.gmra.mxu0 %v888
    %v979 = vpop.f32.mrf.mxu0
    %v980 = vadd.f32 %v842, %v979
    %981 = vmatmul.f32.gmra.mxu0 %v891
    %v982 = vpop.f32.mrf.mxu0
    %v983 = vadd.f32 %v842, %v982
    %984 = vmatmul.f32.gmra.mxu0 %v894
    %v985 = vpop.f32.mrf.mxu0
    %v986 = vadd.f32 %v842, %v985
    %987 = vmatmul.f32.gmra.mxu0 %v897
    %v988 = vpop.f32.mrf.mxu0
    %v989 = vadd.f32 %v842, %v988
    %990 = vmatmul.f32.gmra.mxu0 %v900
    %v991 = vpop.f32.mrf.mxu0
    %v992 = vadd.f32 %v842, %v991
    %993 = vmatmul.f32.gmra.mxu0 %v903
    %v994 = vpop.f32.mrf.mxu0
    %v995 = vadd.f32 %v842, %v994
    %996 = vmatmul.f32.gmra.mxu0 %v906
    %v997 = vpop.f32.mrf.mxu0
    %v998 = vadd.f32 %v842, %v997
    %999 = vmatmul.f32.gmra.mxu0 %v909
    %v1000 = vpop.f32.mrf.mxu0
    %v1001 = vadd.f32 %v842, %v1000
    %1002 = vmatmul.f32.gmra.mxu0 %v912
    %v1003 = vpop.f32.mrf.mxu0
    %v1004 = vadd.f32 %v842, %v1003
    %1005 = vmatmul.f32.gmra.mxu0 %v915
    %v1006 = vpop.f32.mrf.mxu0
    %v1007 = vadd.f32 %v842, %v1006
    %1008 = vmatmul.f32.gmra.mxu0 %v918
    %v1009 = vpop.f32.mrf.mxu0
    %v1010 = vadd.f32 %v842, %v1009
    %1011 = vdwg.mxu0
    %vm1012 = vcmp.gt.f32.partialorder %v938, 0.0
    %vm1013 = vcmp.gt.f32.partialorder %v941, 0.0
    %vm1014 = vcmp.gt.f32.partialorder %v944, 0.0
    %vm1015 = vcmp.gt.f32.partialorder %v947, 0.0
    %vm1016 = vcmp.gt.f32.partialorder %v950, 0.0
    %vm1017 = vcmp.gt.f32.partialorder %v953, 0.0
    %vm1018 = vcmp.gt.f32.partialorder %v956, 0.0
    %vm1019 = vcmp.gt.f32.partialorder %v959, 0.0
    %vm1020 = vcmp.gt.f32.partialorder %v962, 0.0
    %vm1021 = vcmp.gt.f32.partialorder %v965, 0.0
    %vm1022 = vcmp.gt.f32.partialorder %v968, 0.0
    %vm1023 = vcmp.gt.f32.partialorder %v971, 0.0
    %vm1024 = vcmp.gt.f32.partialorder %v974, 0.0
    %vm1025 = vcmp.gt.f32.partialorder %v977, 0.0
    %vm1026 = vcmp.gt.f32.partialorder %v980, 0.0
    %vm1027 = vcmp.gt.f32.partialorder %v983, 0.0
    %vm1028 = vcmp.gt.f32.partialorder %v986, 0.0
    %vm1029 = vcmp.gt.f32.partialorder %v989, 0.0
    %vm1030 = vcmp.gt.f32.partialorder %v992, 0.0
    %vm1031 = vcmp.gt.f32.partialorder %v995, 0.0
    %vm1032 = vcmp.gt.f32.partialorder %v998, 0.0
    %vm1033 = vcmp.gt.f32.partialorder %v1001, 0.0
    %vm1034 = vcmp.gt.f32.partialorder %v1004, 0.0
    %vm1035 = vcmp.gt.f32.partialorder %v1007, 0.0
    %vm1036 = vcmp.gt.f32.partialorder %v1010, 0.0
    %v1037 = vmul.f32 %v938, 0.01
    %v1038 = vmul.f32 %v941, 0.01
    %v1039 = vmul.f32 %v944, 0.01
    %v1040 = vmul.f32 %v947, 0.01
    %v1041 = vmul.f32 %v950, 0.01
    %v1042 = vmul.f32 %v953, 0.01
    %v1043 = vmul.f32 %v956, 0.01
    %v1044 = vmul.f32 %v959, 0.01
    %v1045 = vmul.f32 %v962, 0.01
    %v1046 = vmul.f32 %v965, 0.01
    %v1047 = vmul.f32 %v968, 0.01
    %v1048 = vmul.f32 %v971, 0.01
    %v1049 = vmul.f32 %v974, 0.01
    %v1050 = vmul.f32 %v977, 0.01
    %v1051 = vmul.f32 %v980, 0.01
    %v1052 = vmul.f32 %v983, 0.01
    %v1053 = vmul.f32 %v986, 0.01
    %v1054 = vmul.f32 %v989, 0.01
    %v1055 = vmul.f32 %v992, 0.01
    %v1056 = vmul.f32 %v995, 0.01
    %v1057 = vmul.f32 %v998, 0.01
    %v1058 = vmul.f32 %v1001, 0.01
    %v1059 = vmul.f32 %v1004, 0.01
    %v1060 = vmul.f32 %v1007, 0.01
    %v1061 = vmul.f32 %v1010, 0.01
    %v1062 = vsel %vm1012, %v938, %v1037
    %v1063 = vsel %vm1013, %v941, %v1038
    %v1064 = vsel %vm1014, %v944, %v1039
    %v1065 = vsel %vm1015, %v947, %v1040
    %v1066 = vsel %vm1016, %v950, %v1041
    %v1067 = vsel %vm1017, %v953, %v1042
    %v1068 = vsel %vm1018, %v956, %v1043
    %v1069 = vsel %vm1019, %v959, %v1044
    %v1070 = vsel %vm1020, %v962, %v1045
    %v1071 = vsel %vm1021, %v965, %v1046
    %v1072 = vsel %vm1022, %v968, %v1047
    %v1073 = vsel %vm1023, %v971, %v1048
    %v1074 = vsel %vm1024, %v974, %v1049
    %v1075 = vsel %vm1025, %v977, %v1050
    %v1076 = vsel %vm1026, %v980, %v1051
    %v1077 = vsel %vm1027, %v983, %v1052
    %v1078 = vsel %vm1028, %v986, %v1053
    %v1079 = vsel %vm1029, %v989, %v1054
    %v1080 = vsel %vm1030, %v992, %v1055
    %v1081 = vsel %vm1031, %v995, %v1056
    %v1082 = vsel %vm1032, %v998, %v1057
    %v1083 = vsel %vm1033, %v1001, %v1058
    %v1084 = vsel %vm1034, %v1004, %v1059
    %v1085 = vsel %vm1035, %v1007, %v1060
    %v1086 = vsel %vm1036, %v1010, %v1061
    %v1087 = vld [vmem:[%s9] sm:$0xff]
    %v1088 = vld [vmem:[%s9 + $0x8] sm:$0xff]
    %v1089 = vld [vmem:[%s9 + $0x10] sm:$0xff]
    %v1090 = vld [vmem:[%s9 + $0x18] sm:$0xff]
    %v1091 = vld [vmem:[%s9 + $0x20] sm:$0xff]
    %v1092 = vld [vmem:[%s10] sm:$0x1]
    %v1094 = vperm.slane %v1092, 0
    %v1097 = vsel %vm844, %v1062, 0
    %v1100 = vsel %vm844, %v1063, 0
    %v1103 = vsel %vm844, %v1064, 0
    %v1106 = vsel %vm844, %v1065, 0
    %v1109 = vsel %vm844, %v1066, 0
    %v1112 = vsel %vm844, %v1067, 0
    %v1115 = vsel %vm844, %v1068, 0
    %v1118 = vsel %vm844, %v1069, 0
    %v1121 = vsel %vm844, %v1070, 0
    %v1124 = vsel %vm844, %v1071, 0
    %v1127 = vsel %vm844, %v1072, 0
    %v1130 = vsel %vm844, %v1073, 0
    %v1133 = vsel %vm844, %v1074, 0
    %v1136 = vsel %vm844, %v1075, 0
    %v1139 = vsel %vm844, %v1076, 0
    %v1142 = vsel %vm844, %v1077, 0
    %v1145 = vsel %vm844, %v1078, 0
    %v1148 = vsel %vm844, %v1079, 0
    %v1151 = vsel %vm844, %v1080, 0
    %v1154 = vsel %vm844, %v1081, 0
    %v1157 = vsel %vm844, %v1082, 0
    %v1160 = vsel %vm844, %v1083, 0
    %v1163 = vsel %vm844, %v1084, 0
    %v1166 = vsel %vm844, %v1085, 0
    %v1169 = vsel %vm844, %v1086, 0
    %1171 = vmatpush.msra.mxu0 0.0
    %1172 = vmatpush.msra.mxu0 0.0
    %1173 = vmatpush.msra.mxu0 0.0
    %1174 = vmatpush.msra.mxu0 0.0
    %1175 = vmatpush.msra.mxu0 0.0
    %1176 = vmatpush.msra.mxu0 0.0
    %1177 = vmatpush.msra.mxu0 0.0
    %1178 = vmatpush.msra.mxu0 0.0
    %1179 = vmatpush.msra.mxu0 0.0
    %1180 = vmatpush.msra.mxu0 0.0
    %1181 = vmatpush.msra.mxu0 0.0
    %1182 = vmatpush.msra.mxu0 %v1091
    %1183 = vmatpush.msra.mxu0 %v1090
    %1184 = vmatpush.msra.mxu0 %v1089
    %1185 = vmatpush.msra.mxu0 %v1088
    %1186 = vmatpush.msra.mxu0 %v1087
    %1187 = vmatmul.f32.gmra.mxu0 %v1097
    %v1188 = vpop.f32.mrf.mxu0
    %v1189 = vadd.f32 %v1094, %v1188
    %1190 = vmatmul.f32.gmra.mxu0 %v1100
    %v1191 = vpop.f32.mrf.mxu0
    %v1192 = vadd.f32 %v1094, %v1191
    %1193 = vmatmul.f32.gmra.mxu0 %v1103
    %v1194 = vpop.f32.mrf.mxu0
    %v1195 = vadd.f32 %v1094, %v1194
    %1196 = vmatmul.f32.gmra.mxu0 %v1106
    %v1197 = vpop.f32.mrf.mxu0
    %v1198 = vadd.f32 %v1094, %v1197
    %1199 = vmatmul.f32.gmra.mxu0 %v1109
    %v1200 = vpop.f32.mrf.mxu0
    %v1201 = vadd.f32 %v1094, %v1200
    %1202 = vmatmul.f32.gmra.mxu0 %v1112
    %v1203 = vpop.f32.mrf.mxu0
    %v1204 = vadd.f32 %v1094, %v1203
    %1205 = vmatmul.f32.gmra.mxu0 %v1115
    %v1206 = vpop.f32.mrf.mxu0
    %v1207 = vadd.f32 %v1094, %v1206
    %1208 = vmatmul.f32.gmra.mxu0 %v1118
    %v1209 = vpop.f32.mrf.mxu0
    %v1210 = vadd.f32 %v1094, %v1209
    %1211 = vmatmul.f32.gmra.mxu0 %v1121
    %v1212 = vpop.f32.mrf.mxu0
    %v1213 = vadd.f32 %v1094, %v1212
    %1214 = vmatmul.f32.gmra.mxu0 %v1124
    %v1215 = vpop.f32.mrf.mxu0
    %v1216 = vadd.f32 %v1094, %v1215
    %1217 = vmatmul.f32.gmra.mxu0 %v1127
    %v1218 = vpop.f32.mrf.mxu0
    %v1219 = vadd.f32 %v1094, %v1218
    %1220 = vmatmul.f32.gmra.mxu0 %v1130
    %v1221 = vpop.f32.mrf.mxu0
    %v1222 = vadd.f32 %v1094, %v1221
    %1223 = vmatmul.f32.gmra.mxu0 %v1133
    %v1224 = vpop.f32.mrf.mxu0
    %v1225 = vadd.f32 %v1094, %v1224
    %1226 = vmatmul.f32.gmra.mxu0 %v1136
    %v1227 = vpop.f32.mrf.mxu0
    %v1228 = vadd.f32 %v1094, %v1227
    %1229 = vmatmul.f32.gmra.mxu0 %v1139
    %v1230 = vpop.f32.mrf.mxu0
    %v1231 = vadd.f32 %v1094, %v1230
    %1232 = vmatmul.f32.gmra.mxu0 %v1142
    %v1233 = vpop.f32.mrf.mxu0
    %v1234 = vadd.f32 %v1094, %v1233
    %1235 = vmatmul.f32.gmra.mxu0 %v1145
    %v1236 = vpop.f32.mrf.mxu0
    %v1237 = vadd.f32 %v1094, %v1236
    %1238 = vmatmul.f32.gmra.mxu0 %v1148
    %v1239 = vpop.f32.mrf.mxu0
    %v1240 = vadd.f32 %v1094, %v1239
    %1241 = vmatmul.f32.gmra.mxu0 %v1151
    %v1242 = vpop.f32.mrf.mxu0
    %v1243 = vadd.f32 %v1094, %v1242
    %1244 = vmatmul.f32.gmra.mxu0 %v1154
    %v1245 = vpop.f32.mrf.mxu0
    %v1246 = vadd.f32 %v1094, %v1245
    %1247 = vmatmul.f32.gmra.mxu0 %v1157
    %v1248 = vpop.f32.mrf.mxu0
    %v1249 = vadd.f32 %v1094, %v1248
    %1250 = vmatmul.f32.gmra.mxu0 %v1160
    %v1251 = vpop.f32.mrf.mxu0
    %v1252 = vadd.f32 %v1094, %v1251
    %1253 = vmatmul.f32.gmra.mxu0 %v1163
    %v1254 = vpop.f32.mrf.mxu0
    %v1255 = vadd.f32 %v1094, %v1254
    %1256 = vmatmul.f32.gmra.mxu0 %v1166
    %v1257 = vpop.f32.mrf.mxu0
    %v1258 = vadd.f32 %v1094, %v1257
    %1259 = vmatmul.f32.gmra.mxu0 %v1169
    %v1260 = vpop.f32.mrf.mxu0
    %v1261 = vadd.f32 %v1094, %v1260
    %1262 = vdwg.mxu0
    %vm1263 = vcmp.gt.f32.partialorder %v1189, 0.0
    %vm1264 = vcmp.gt.f32.partialorder %v1192, 0.0
    %vm1265 = vcmp.gt.f32.partialorder %v1195, 0.0
    %vm1266 = vcmp.gt.f32.partialorder %v1198, 0.0
    %vm1267 = vcmp.gt.f32.partialorder %v1201, 0.0
    %vm1268 = vcmp.gt.f32.partialorder %v1204, 0.0
    %vm1269 = vcmp.gt.f32.partialorder %v1207, 0.0
    %vm1270 = vcmp.gt.f32.partialorder %v1210, 0.0
    %vm1271 = vcmp.gt.f32.partialorder %v1213, 0.0
    %vm1272 = vcmp.gt.f32.partialorder %v1216, 0.0
    %vm1273 = vcmp.gt.f32.partialorder %v1219, 0.0
    %vm1274 = vcmp.gt.f32.partialorder %v1222, 0.0
    %vm1275 = vcmp.gt.f32.partialorder %v1225, 0.0
    %vm1276 = vcmp.gt.f32.partialorder %v1228, 0.0
    %vm1277 = vcmp.gt.f32.partialorder %v1231, 0.0
    %vm1278 = vcmp.gt.f32.partialorder %v1234, 0.0
    %vm1279 = vcmp.gt.f32.partialorder %v1237, 0.0
    %vm1280 = vcmp.gt.f32.partialorder %v1240, 0.0
    %vm1281 = vcmp.gt.f32.partialorder %v1243, 0.0
    %vm1282 = vcmp.gt.f32.partialorder %v1246, 0.0
    %vm1283 = vcmp.gt.f32.partialorder %v1249, 0.0
    %vm1284 = vcmp.gt.f32.partialorder %v1252, 0.0
    %vm1285 = vcmp.gt.f32.partialorder %v1255, 0.0
    %vm1286 = vcmp.gt.f32.partialorder %v1258, 0.0
    %vm1287 = vcmp.gt.f32.partialorder %v1261, 0.0
    %v1288 = vmul.f32 %v1189, 0.01
    %v1289 = vmul.f32 %v1192, 0.01
    %v1290 = vmul.f32 %v1195, 0.01
    %v1291 = vmul.f32 %v1198, 0.01
    %v1292 = vmul.f32 %v1201, 0.01
    %v1293 = vmul.f32 %v1204, 0.01
    %v1294 = vmul.f32 %v1207, 0.01
    %v1295 = vmul.f32 %v1210, 0.01
    %v1296 = vmul.f32 %v1213, 0.01
    %v1297 = vmul.f32 %v1216, 0.01
    %v1298 = vmul.f32 %v1219, 0.01
    %v1299 = vmul.f32 %v1222, 0.01
    %v1300 = vmul.f32 %v1225, 0.01
    %v1301 = vmul.f32 %v1228, 0.01
    %v1302 = vmul.f32 %v1231, 0.01
    %v1303 = vmul.f32 %v1234, 0.01
    %v1304 = vmul.f32 %v1237, 0.01
    %v1305 = vmul.f32 %v1240, 0.01
    %v1306 = vmul.f32 %v1243, 0.01
    %v1307 = vmul.f32 %v1246, 0.01
    %v1308 = vmul.f32 %v1249, 0.01
    %v1309 = vmul.f32 %v1252, 0.01
    %v1310 = vmul.f32 %v1255, 0.01
    %v1311 = vmul.f32 %v1258, 0.01
    %v1312 = vmul.f32 %v1261, 0.01
    %v1313 = vsel %vm1263, %v1189, %v1288
    %v1314 = vsel %vm1264, %v1192, %v1289
    %v1315 = vsel %vm1265, %v1195, %v1290
    %v1316 = vsel %vm1266, %v1198, %v1291
    %v1317 = vsel %vm1267, %v1201, %v1292
    %v1318 = vsel %vm1268, %v1204, %v1293
    %v1319 = vsel %vm1269, %v1207, %v1294
    %v1320 = vsel %vm1270, %v1210, %v1295
    %v1321 = vsel %vm1271, %v1213, %v1296
    %v1322 = vsel %vm1272, %v1216, %v1297
    %v1323 = vsel %vm1273, %v1219, %v1298
    %v1324 = vsel %vm1274, %v1222, %v1299
    %v1325 = vsel %vm1275, %v1225, %v1300
    %v1326 = vsel %vm1276, %v1228, %v1301
    %v1327 = vsel %vm1277, %v1231, %v1302
    %v1328 = vsel %vm1278, %v1234, %v1303
    %v1329 = vsel %vm1279, %v1237, %v1304
    %v1330 = vsel %vm1280, %v1240, %v1305
    %v1331 = vsel %vm1281, %v1243, %v1306
    %v1332 = vsel %vm1282, %v1246, %v1307
    %v1333 = vsel %vm1283, %v1249, %v1308
    %v1334 = vsel %vm1284, %v1252, %v1309
    %v1335 = vsel %vm1285, %v1255, %v1310
    %v1336 = vsel %vm1286, %v1258, %v1311
    %v1337 = vsel %vm1287, %v1261, %v1312
    %v1338 = vld [vmem:[%s11] sm:$0xff]
    %v1339 = vld [vmem:[%s11 + $0x8] sm:$0xff]
    %v1340 = vld [vmem:[%s11 + $0x10] sm:$0xff]
    %v1341 = vld [vmem:[%s11 + $0x18] sm:$0xff]
    %v1342 = vld [vmem:[%s11 + $0x20] sm:$0xff]
    %v1343 = vld [vmem:[%s11 + $0x28] sm:$0xff]
    %v1344 = vld [vmem:[%s12] sm:$0x1]
    %v1346 = vperm.slane %v1344, 0
    %v1349 = vsel %vm592, %v1313, 0
    %v1352 = vsel %vm592, %v1314, 0
    %v1355 = vsel %vm592, %v1315, 0
    %v1358 = vsel %vm592, %v1316, 0
    %v1361 = vsel %vm592, %v1317, 0
    %v1364 = vsel %vm592, %v1318, 0
    %v1367 = vsel %vm592, %v1319, 0
    %v1370 = vsel %vm592, %v1320, 0
    %v1373 = vsel %vm592, %v1321, 0
    %v1376 = vsel %vm592, %v1322, 0
    %v1379 = vsel %vm592, %v1323, 0
    %v1382 = vsel %vm592, %v1324, 0
    %v1385 = vsel %vm592, %v1325, 0
    %v1388 = vsel %vm592, %v1326, 0
    %v1391 = vsel %vm592, %v1327, 0
    %v1394 = vsel %vm592, %v1328, 0
    %v1397 = vsel %vm592, %v1329, 0
    %v1400 = vsel %vm592, %v1330, 0
    %v1403 = vsel %vm592, %v1331, 0
    %v1406 = vsel %vm592, %v1332, 0
    %v1409 = vsel %vm592, %v1333, 0
    %v1412 = vsel %vm592, %v1334, 0
    %v1415 = vsel %vm592, %v1335, 0
    %v1418 = vsel %vm592, %v1336, 0
    %v1421 = vsel %vm592, %v1337, 0
    %1423 = vmatpush.msra.mxu0 0.0
    %1424 = vmatpush.msra.mxu0 0.0
    %1425 = vmatpush.msra.mxu0 0.0
    %1426 = vmatpush.msra.mxu0 0.0
    %1427 = vmatpush.msra.mxu0 0.0
    %1428 = vmatpush.msra.mxu0 0.0
    %1429 = vmatpush.msra.mxu0 0.0
    %1430 = vmatpush.msra.mxu0 0.0
    %1431 = vmatpush.msra.mxu0 0.0
    %1432 = vmatpush.msra.mxu0 0.0
    %1433 = vmatpush.msra.mxu0 %v1343
    %1434 = vmatpush.msra.mxu0 %v1342
    %1435 = vmatpush.msra.mxu0 %v1341
    %1436 = vmatpush.msra.mxu0 %v1340
    %1437 = vmatpush.msra.mxu0 %v1339
    %1438 = vmatpush.msra.mxu0 %v1338
    %1439 = vmatmul.f32.gmra.mxu0 %v1349
    %v1440 = vpop.f32.mrf.mxu0
    %v1441 = vadd.f32 %v1346, %v1440
    %1442 = vmatmul.f32.gmra.mxu0 %v1352
    %v1443 = vpop.f32.mrf.mxu0
    %v1444 = vadd.f32 %v1346, %v1443
    %1445 = vmatmul.f32.gmra.mxu0 %v1355
    %v1446 = vpop.f32.mrf.mxu0
    %v1447 = vadd.f32 %v1346, %v1446
    %1448 = vmatmul.f32.gmra.mxu0 %v1358
    %v1449 = vpop.f32.mrf.mxu0
    %v1450 = vadd.f32 %v1346, %v1449
    %1451 = vmatmul.f32.gmra.mxu0 %v1361
    %v1452 = vpop.f32.mrf.mxu0
    %v1453 = vadd.f32 %v1346, %v1452
    %1454 = vmatmul.f32.gmra.mxu0 %v1364
    %v1455 = vpop.f32.mrf.mxu0
    %v1456 = vadd.f32 %v1346, %v1455
    %1457 = vmatmul.f32.gmra.mxu0 %v1367
    %v1458 = vpop.f32.mrf.mxu0
    %v1459 = vadd.f32 %v1346, %v1458
    %1460 = vmatmul.f32.gmra.mxu0 %v1370
    %v1461 = vpop.f32.mrf.mxu0
    %v1462 = vadd.f32 %v1346, %v1461
    %1463 = vmatmul.f32.gmra.mxu0 %v1373
    %v1464 = vpop.f32.mrf.mxu0
    %v1465 = vadd.f32 %v1346, %v1464
    %1466 = vmatmul.f32.gmra.mxu0 %v1376
    %v1467 = vpop.f32.mrf.mxu0
    %v1468 = vadd.f32 %v1346, %v1467
    %1469 = vmatmul.f32.gmra.mxu0 %v1379
    %v1470 = vpop.f32.mrf.mxu0
    %v1471 = vadd.f32 %v1346, %v1470
    %1472 = vmatmul.f32.gmra.mxu0 %v1382
    %v1473 = vpop.f32.mrf.mxu0
    %v1474 = vadd.f32 %v1346, %v1473
    %1475 = vmatmul.f32.gmra.mxu0 %v1385
    %v1476 = vpop.f32.mrf.mxu0
    %v1477 = vadd.f32 %v1346, %v1476
    %1478 = vmatmul.f32.gmra.mxu0 %v1388
    %v1479 = vpop.f32.mrf.mxu0
    %v1480 = vadd.f32 %v1346, %v1479
    %1481 = vmatmul.f32.gmra.mxu0 %v1391
    %v1482 = vpop.f32.mrf.mxu0
    %v1483 = vadd.f32 %v1346, %v1482
    %1484 = vmatmul.f32.gmra.mxu0 %v1394
    %v1485 = vpop.f32.mrf.mxu0
    %v1486 = vadd.f32 %v1346, %v1485
    %1487 = vmatmul.f32.gmra.mxu0 %v1397
    %v1488 = vpop.f32.mrf.mxu0
    %v1489 = vadd.f32 %v1346, %v1488
    %1490 = vmatmul.f32.gmra.mxu0 %v1400
    %v1491 = vpop.f32.mrf.mxu0
    %v1492 = vadd.f32 %v1346, %v1491
    %1493 = vmatmul.f32.gmra.mxu0 %v1403
    %v1494 = vpop.f32.mrf.mxu0
    %v1495 = vadd.f32 %v1346, %v1494
    %1496 = vmatmul.f32.gmra.mxu0 %v1406
    %v1497 = vpop.f32.mrf.mxu0
    %v1498 = vadd.f32 %v1346, %v1497
    %1499 = vmatmul.f32.gmra.mxu0 %v1409
    %v1500 = vpop.f32.mrf.mxu0
    %v1501 = vadd.f32 %v1346, %v1500
    %1502 = vmatmul.f32.gmra.mxu0 %v1412
    %v1503 = vpop.f32.mrf.mxu0
    %v1504 = vadd.f32 %v1346, %v1503
    %1505 = vmatmul.f32.gmra.mxu0 %v1415
    %v1506 = vpop.f32.mrf.mxu0
    %v1507 = vadd.f32 %v1346, %v1506
    %1508 = vmatmul.f32.gmra.mxu0 %v1418
    %v1509 = vpop.f32.mrf.mxu0
    %v1510 = vadd.f32 %v1346, %v1509
    %1511 = vmatmul.f32.gmra.mxu0 %v1421
    %v1512 = vpop.f32.mrf.mxu0
    %v1513 = vadd.f32 %v1346, %v1512
    %1514 = vdwg.mxu0
    %vm1515 = vcmp.gt.f32.partialorder %v1441, 0.0
    %vm1516 = vcmp.gt.f32.partialorder %v1444, 0.0
    %vm1517 = vcmp.gt.f32.partialorder %v1447, 0.0
    %vm1518 = vcmp.gt.f32.partialorder %v1450, 0.0
    %vm1519 = vcmp.gt.f32.partialorder %v1453, 0.0
    %vm1520 = vcmp.gt.f32.partialorder %v1456, 0.0
    %vm1521 = vcmp.gt.f32.partialorder %v1459, 0.0
    %vm1522 = vcmp.gt.f32.partialorder %v1462, 0.0
    %vm1523 = vcmp.gt.f32.partialorder %v1465, 0.0
    %vm1524 = vcmp.gt.f32.partialorder %v1468, 0.0
    %vm1525 = vcmp.gt.f32.partialorder %v1471, 0.0
    %vm1526 = vcmp.gt.f32.partialorder %v1474, 0.0
    %vm1527 = vcmp.gt.f32.partialorder %v1477, 0.0
    %vm1528 = vcmp.gt.f32.partialorder %v1480, 0.0
    %vm1529 = vcmp.gt.f32.partialorder %v1483, 0.0
    %vm1530 = vcmp.gt.f32.partialorder %v1486, 0.0
    %vm1531 = vcmp.gt.f32.partialorder %v1489, 0.0
    %vm1532 = vcmp.gt.f32.partialorder %v1492, 0.0
    %vm1533 = vcmp.gt.f32.partialorder %v1495, 0.0
    %vm1534 = vcmp.gt.f32.partialorder %v1498, 0.0
    %vm1535 = vcmp.gt.f32.partialorder %v1501, 0.0
    %vm1536 = vcmp.gt.f32.partialorder %v1504, 0.0
    %vm1537 = vcmp.gt.f32.partialorder %v1507, 0.0
    %vm1538 = vcmp.gt.f32.partialorder %v1510, 0.0
    %vm1539 = vcmp.gt.f32.partialorder %v1513, 0.0
    %v1540 = vmul.f32 %v1441, 0.01
    %v1541 = vmul.f32 %v1444, 0.01
    %v1542 = vmul.f32 %v1447, 0.01
    %v1543 = vmul.f32 %v1450, 0.01
    %v1544 = vmul.f32 %v1453, 0.01
    %v1545 = vmul.f32 %v1456, 0.01
    %v1546 = vmul.f32 %v1459, 0.01
    %v1547 = vmul.f32 %v1462, 0.01
    %v1548 = vmul.f32 %v1465, 0.01
    %v1549 = vmul.f32 %v1468, 0.01
    %v1550 = vmul.f32 %v1471, 0.01
    %v1551 = vmul.f32 %v1474, 0.01
    %v1552 = vmul.f32 %v1477, 0.01
    %v1553 = vmul.f32 %v1480, 0.01
    %v1554 = vmul.f32 %v1483, 0.01
    %v1555 = vmul.f32 %v1486, 0.01
    %v1556 = vmul.f32 %v1489, 0.01
    %v1557 = vmul.f32 %v1492, 0.01
    %v1558 = vmul.f32 %v1495, 0.01
    %v1559 = vmul.f32 %v1498, 0.01
    %v1560 = vmul.f32 %v1501, 0.01
    %v1561 = vmul.f32 %v1504, 0.01
    %v1562 = vmul.f32 %v1507, 0.01
    %v1563 = vmul.f32 %v1510, 0.01
    %v1564 = vmul.f32 %v1513, 0.01
    %v1565 = vsel %vm1515, %v1441, %v1540
    %v1566 = vsel %vm1516, %v1444, %v1541
    %v1567 = vsel %vm1517, %v1447, %v1542
    %v1568 = vsel %vm1518, %v1450, %v1543
    %v1569 = vsel %vm1519, %v1453, %v1544
    %v1570 = vsel %vm1520, %v1456, %v1545
    %v1571 = vsel %vm1521, %v1459, %v1546
    %v1572 = vsel %vm1522, %v1462, %v1547
    %v1573 = vsel %vm1523, %v1465, %v1548
    %v1574 = vsel %vm1524, %v1468, %v1549
    %v1575 = vsel %vm1525, %v1471, %v1550
    %v1576 = vsel %vm1526, %v1474, %v1551
    %v1577 = vsel %vm1527, %v1477, %v1552
    %v1578 = vsel %vm1528, %v1480, %v1553
    %v1579 = vsel %vm1529, %v1483, %v1554
    %v1580 = vsel %vm1530, %v1486, %v1555
    %v1581 = vsel %vm1531, %v1489, %v1556
    %v1582 = vsel %vm1532, %v1492, %v1557
    %v1583 = vsel %vm1533, %v1495, %v1558
    %v1584 = vsel %vm1534, %v1498, %v1559
    %v1585 = vsel %vm1535, %v1501, %v1560
    %v1586 = vsel %vm1536, %v1504, %v1561
    %v1587 = vsel %vm1537, %v1507, %v1562
    %v1588 = vsel %vm1538, %v1510, %v1563
    %v1589 = vsel %vm1539, %v1513, %v1564
    %v1590 = vld [vmem:[%s13] sm:$0xff]
    %v1591 = vld [vmem:[%s13 + $0x8] sm:$0xff]
    %v1592 = vld [vmem:[%s13 + $0x10] sm:$0xff]
    %v1593 = vld [vmem:[%s13 + $0x18] sm:$0xff]
    %v1594 = vld [vmem:[%s13 + $0x20] sm:$0xff]
    %v1595 = vld [vmem:[%s13 + $0x28] sm:$0xff]
    %v1596 = vld [vmem:[%s13 + $0x30] sm:$0xff]
    %v1597 = vld [vmem:[%s13 + $0x38] sm:$0xff]
    %v1598 = vld [vmem:[%s14] sm:$0x1]
    %v1600 = vperm.slane %v1598, 0
    %v1603 = vsel %vm339, %v1565, 0
    %v1606 = vsel %vm339, %v1566, 0
    %v1609 = vsel %vm339, %v1567, 0
    %v1612 = vsel %vm339, %v1568, 0
    %v1615 = vsel %vm339, %v1569, 0
    %v1618 = vsel %vm339, %v1570, 0
    %v1621 = vsel %vm339, %v1571, 0
    %v1624 = vsel %vm339, %v1572, 0
    %v1627 = vsel %vm339, %v1573, 0
    %v1630 = vsel %vm339, %v1574, 0
    %v1633 = vsel %vm339, %v1575, 0
    %v1636 = vsel %vm339, %v1576, 0
    %v1639 = vsel %vm339, %v1577, 0
    %v1642 = vsel %vm339, %v1578, 0
    %v1645 = vsel %vm339, %v1579, 0
    %v1648 = vsel %vm339, %v1580, 0
    %v1651 = vsel %vm339, %v1581, 0
    %v1654 = vsel %vm339, %v1582, 0
    %v1657 = vsel %vm339, %v1583, 0
    %v1660 = vsel %vm339, %v1584, 0
    %v1663 = vsel %vm339, %v1585, 0
    %v1666 = vsel %vm339, %v1586, 0
    %v1669 = vsel %vm339, %v1587, 0
    %v1672 = vsel %vm339, %v1588, 0
    %v1675 = vsel %vm339, %v1589, 0
    %1677 = vmatpush.msra.mxu0 0.0
    %1678 = vmatpush.msra.mxu0 0.0
    %1679 = vmatpush.msra.mxu0 0.0
    %1680 = vmatpush.msra.mxu0 0.0
    %1681 = vmatpush.msra.mxu0 0.0
    %1682 = vmatpush.msra.mxu0 0.0
    %1683 = vmatpush.msra.mxu0 0.0
    %1684 = vmatpush.msra.mxu0 0.0
    %1685 = vmatpush.msra.mxu0 %v1597
    %1686 = vmatpush.msra.mxu0 %v1596
    %1687 = vmatpush.msra.mxu0 %v1595
    %1688 = vmatpush.msra.mxu0 %v1594
    %1689 = vmatpush.msra.mxu0 %v1593
    %1690 = vmatpush.msra.mxu0 %v1592
    %1691 = vmatpush.msra.mxu0 %v1591
    %1692 = vmatpush.msra.mxu0 %v1590
    %1693 = vmatmul.f32.gmra.mxu0 %v1603
    %v1694 = vpop.f32.mrf.mxu0
    %v1695 = vadd.f32 %v1600, %v1694
    %1696 = vmatmul.f32.gmra.mxu0 %v1606
    %v1697 = vpop.f32.mrf.mxu0
    %v1698 = vadd.f32 %v1600, %v1697
    %1699 = vmatmul.f32.gmra.mxu0 %v1609
    %v1700 = vpop.f32.mrf.mxu0
    %v1701 = vadd.f32 %v1600, %v1700
    %1702 = vmatmul.f32.gmra.mxu0 %v1612
    %v1703 = vpop.f32.mrf.mxu0
    %v1704 = vadd.f32 %v1600, %v1703
    %1705 = vmatmul.f32.gmra.mxu0 %v1615
    %v1706 = vpop.f32.mrf.mxu0
    %v1707 = vadd.f32 %v1600, %v1706
    %1708 = vmatmul.f32.gmra.mxu0 %v1618
    %v1709 = vpop.f32.mrf.mxu0
    %v1710 = vadd.f32 %v1600, %v1709
    %1711 = vmatmul.f32.gmra.mxu0 %v1621
    %v1712 = vpop.f32.mrf.mxu0
    %v1713 = vadd.f32 %v1600, %v1712
    %1714 = vmatmul.f32.gmra.mxu0 %v1624
    %v1715 = vpop.f32.mrf.mxu0
    %v1716 = vadd.f32 %v1600, %v1715
    %1717 = vmatmul.f32.gmra.mxu0 %v1627
    %v1718 = vpop.f32.mrf.mxu0
    %v1719 = vadd.f32 %v1600, %v1718
    %1720 = vmatmul.f32.gmra.mxu0 %v1630
    %v1721 = vpop.f32.mrf.mxu0
    %v1722 = vadd.f32 %v1600, %v1721
    %1723 = vmatmul.f32.gmra.mxu0 %v1633
    %v1724 = vpop.f32.mrf.mxu0
    %v1725 = vadd.f32 %v1600, %v1724
    %1726 = vmatmul.f32.gmra.mxu0 %v1636
    %v1727 = vpop.f32.mrf.mxu0
    %v1728 = vadd.f32 %v1600, %v1727
    %1729 = vmatmul.f32.gmra.mxu0 %v1639
    %v1730 = vpop.f32.mrf.mxu0
    %v1731 = vadd.f32 %v1600, %v1730
    %1732 = vmatmul.f32.gmra.mxu0 %v1642
    %v1733 = vpop.f32.mrf.mxu0
    %v1734 = vadd.f32 %v1600, %v1733
    %1735 = vmatmul.f32.gmra.mxu0 %v1645
    %v1736 = vpop.f32.mrf.mxu0
    %v1737 = vadd.f32 %v1600, %v1736
    %1738 = vmatmul.f32.gmra.mxu0 %v1648
    %v1739 = vpop.f32.mrf.mxu0
    %v1740 = vadd.f32 %v1600, %v1739
    %1741 = vmatmul.f32.gmra.mxu0 %v1651
    %v1742 = vpop.f32.mrf.mxu0
    %v1743 = vadd.f32 %v1600, %v1742
    %1744 = vmatmul.f32.gmra.mxu0 %v1654
    %v1745 = vpop.f32.mrf.mxu0
    %v1746 = vadd.f32 %v1600, %v1745
    %1747 = vmatmul.f32.gmra.mxu0 %v1657
    %v1748 = vpop.f32.mrf.mxu0
    %v1749 = vadd.f32 %v1600, %v1748
    %1750 = vmatmul.f32.gmra.mxu0 %v1660
    %v1751 = vpop.f32.mrf.mxu0
    %v1752 = vadd.f32 %v1600, %v1751
    %1753 = vmatmul.f32.gmra.mxu0 %v1663
    %v1754 = vpop.f32.mrf.mxu0
    %v1755 = vadd.f32 %v1600, %v1754
    %1756 = vmatmul.f32.gmra.mxu0 %v1666
    %v1757 = vpop.f32.mrf.mxu0
    %v1758 = vadd.f32 %v1600, %v1757
    %1759 = vmatmul.f32.gmra.mxu0 %v1669
    %v1760 = vpop.f32.mrf.mxu0
    %v1761 = vadd.f32 %v1600, %v1760
    %1762 = vmatmul.f32.gmra.mxu0 %v1672
    %v1763 = vpop.f32.mrf.mxu0
    %v1764 = vadd.f32 %v1600, %v1763
    %1765 = vmatmul.f32.gmra.mxu0 %v1675
    %v1766 = vpop.f32.mrf.mxu0
    %v1767 = vadd.f32 %v1600, %v1766
    %1768 = vdwg.mxu0
    %1769 = vst [vmem:[#allocation2] sm:$0xff] %v1695
    %1770 = vst [vmem:[#allocation2 + $0x8] sm:$0xff] %v1698
    %1771 = vst [vmem:[#allocation2 + $0x10] sm:$0xff] %v1701
    %1772 = vst [vmem:[#allocation2 + $0x18] sm:$0xff] %v1704
    %1773 = vst [vmem:[#allocation2 + $0x20] sm:$0xff] %v1707
    %1774 = vst [vmem:[#allocation2 + $0x28] sm:$0xff] %v1710
    %1775 = vst [vmem:[#allocation2 + $0x30] sm:$0xff] %v1713
    %1776 = vst [vmem:[#allocation2 + $0x38] sm:$0xff] %v1716
    %1777 = vst [vmem:[#allocation2 + $0x40] sm:$0xff] %v1719
    %1778 = vst [vmem:[#allocation2 + $0x48] sm:$0xff] %v1722
    %1779 = vst [vmem:[#allocation2 + $0x50] sm:$0xff] %v1725
    %1780 = vst [vmem:[#allocation2 + $0x58] sm:$0xff] %v1728
    %1781 = vst [vmem:[#allocation2 + $0x60] sm:$0xff] %v1731
    %1782 = vst [vmem:[#allocation2 + $0x68] sm:$0xff] %v1734
    %1783 = vst [vmem:[#allocation2 + $0x70] sm:$0xff] %v1737
    %1784 = vst [vmem:[#allocation2 + $0x78] sm:$0xff] %v1740
    %1785 = vst [vmem:[#allocation2 + $0x80] sm:$0xff] %v1743
    %1786 = vst [vmem:[#allocation2 + $0x88] sm:$0xff] %v1746
    %1787 = vst [vmem:[#allocation2 + $0x90] sm:$0xff] %v1749
    %1788 = vst [vmem:[#allocation2 + $0x98] sm:$0xff] %v1752
    %1789 = vst [vmem:[#allocation2 + $0xa0] sm:$0xff] %v1755
    %1790 = vst [vmem:[#allocation2 + $0xa8] sm:$0xff] %v1758
    %1791 = vst [vmem:[#allocation2 + $0xb0] sm:$0xff] %v1761
    %1792 = vst [vmem:[#allocation2 + $0xb8] sm:$0xff] %v1764
    %1793 = vst [vmem:[#allocation2 + $0xc0] sm:$0xff] %v1767
    // Predicated region
    $region62: #{autoencoder_forward.1} parent=1 // pred_check
      _
    $region63: #{autoencoder_forward.1} parent=1 // pred_check_branch
      %1795 = sbr.rel (0) target = $region65
    $region64: #{autoencoder_forward.1} parent=1 // pred_region
      %1797 = vsyncadd [#allocation3], 0
      %s1798 = sshll.u32 [#allocation2], 4
      %s1799 = int_to_ptr.vmem [resolvable:$true] %s1798
      %s1800 = sshll.u32 %s15, 4
      %s1801 = int_to_ptr.hbm [resolvable:$true] %s1800
      %1806 = dma.vmem_to_hbm [thread:$0]  %s1799, 3200, %s1801, [#allocation3], 128, 128, 8
    $region65: #{autoencoder_forward.1} parent=1 // pred_fallthru
      _
    // Predicated region
    $region66: #{autoencoder_forward.1} parent=1 // pred_check
      _
    $region67: #{autoencoder_forward.1} parent=1 // pred_check_branch
      %1808 = sbr.rel (0) target = $region69
    $region68: #{autoencoder_forward.1} parent=1 // pred_region
      %1810 = dma.done [#allocation3], 3200
    $region69: #{autoencoder_forward.1} parent=1 // pred_fallthru
      _
    %1811 = vsyncpa [#allocation3], 1

</llo_original>
